<compile_context>
chip_gen: v5e
topology: v5e:2x2
jax: 0.10.0
libtpu: 0.0.40
codegen_flags: <defaults>
</compile_context>

<pallas_src>
import functools

import jax
import jax.numpy as jnp
from jax import lax
from jax.experimental import pallas as pl
from jax.experimental.pallas import tpu as pltpu


# ----------------------------------------------------------------------------
# Fused kernel: depthwise 3x3 (+bias+ReLU) into VMEM scratch, then tiled
# pointwise 1x1 matmul (+bias+ReLU) out of that scratch.
# ----------------------------------------------------------------------------
def _fused_dw_pw_kernel(x_ref, dww_ref, b1_ref, pww_ref, b2_ref, o_ref,
                        xpad_ref, y1_ref, *, stride, h, w, oh, ow, tm):
    i = pl.program_id(1)          # row tile of the flattened (oh*ow) axis
    j = pl.program_id(2)          # cout tile

    # ---- stage 1: depthwise 3x3 + bias + ReLU, once per batch element ----
    @pl.when(jnp.logical_and(i == 0, j == 0))
    def _():
        cin = xpad_ref.shape[-1]
        # Build the 1-px zero halo inside VMEM (no HBM pad copy).
        xpad_ref[...] = jnp.zeros_like(xpad_ref)
        xpad_ref[1:h + 1, 1:w + 1, :] = x_ref[0]

        acc = jnp.zeros((oh, ow, cin), jnp.float32)
        for kh in range(3):
            for kw in range(3):
                if stride == 1:
                    win = xpad_ref[kh:kh + oh, kw:kw + ow, :]
                else:
                    # strided window read straight from the scratch ref
                    win = xpad_ref[pl.ds(kh, oh, stride),
                                   pl.ds(kw, ow, stride), :]
                acc = acc + win * dww_ref[kh, kw, :]
        y1 = jnp.maximum(acc + b1_ref[0, :], 0.0)
        # flatten spatial -> rows for the matmul; cast to the MXU dtype
        y1_ref[...] = y1.reshape(oh * ow, cin).astype(y1_ref.dtype)

    # ---- stage 2: pointwise 1x1 as a (tm, cin) @ (cin, tn) matmul ----
    row0 = pl.multiple_of(i * tm, tm)
    lhs = y1_ref[pl.ds(row0, tm), :]
    y2 = jnp.dot(lhs, pww_ref[...], preferred_element_type=jnp.float32)
    y2 = y2 + b2_ref[...]
    o_ref[0] = jnp.maximum(y2, 0.0).astype(o_ref.dtype)


def _fold_bn(gamma, beta, mean, var, eps=1e-5):
    scale = gamma / jnp.sqrt(var + eps)
    bias = beta - mean * scale
    return scale, bias


def _pick_tile(dim, target, multiple):
    """Largest divisor of `dim` <= target that is a multiple of `multiple`;
    falls back to `dim` itself (full extent is always a legal block dim)."""
    d = min(dim, target)
    while d >= multiple:
        if dim % d == 0 and d % multiple == 0:
            return d
        d -= 1
    return dim


def depthwise_conv_forward_nhwc(x_nhwc, params, stride=1,
                                pw_dtype=jnp.bfloat16):
    """Fused _DepthwiseConv forward. x_nhwc: (N, H, W, C_in) float32."""
    dw_w = params["dw_w"]                 # (3, 3, C_in)
    pw_w = params["pw_w"]                 # (C_in, C_out)
    s1, b1 = _fold_bn(*params["bn1"])     # (C_in,)
    s2, b2 = _fold_bn(*params["bn2"])     # (C_out,)

    # Fold BN scales into the weights (kernel only adds bias).
    dw_w_f = (dw_w * s1).astype(jnp.float32)
    pw_w_f = (pw_w * s2[None, :]).astype(pw_dtype)

    n, h, w, cin = x_nhwc.shape
    cout = pw_w.shape[1]
    oh = (h + 2 - 3) // stride + 1
    ow = (w + 2 - 3) // stride + 1
    m = oh * ow

    tm = _pick_tile(m, 512, 8)            # matmul row tile
    tn = _pick_tile(cout, 256, 128)       # matmul cout tile
    grid = (n, m // tm, cout // tn)

    kernel = functools.partial(_fused_dw_pw_kernel, stride=stride,
                               h=h, w=w, oh=oh, ow=ow, tm=tm)

    out = pl.pallas_call(
        kernel,
        out_shape=jax.ShapeDtypeStruct((n, m, cout), x_nhwc.dtype),
        grid=grid,
        in_specs=[
            pl.BlockSpec((1, h, w, cin), lambda b, i, j: (b, 0, 0, 0)),  # x
            pl.BlockSpec((3, 3, cin), lambda b, i, j: (0, 0, 0)),        # dw_w
            pl.BlockSpec((1, cin), lambda b, i, j: (0, 0)),              # b1
            pl.BlockSpec((cin, tn), lambda b, i, j: (0, j)),             # pw_w
            pl.BlockSpec((1, tn), lambda b, i, j: (0, j)),               # b2
        ],
        out_specs=pl.BlockSpec((1, tm, tn), lambda b, i, j: (b, i, j)),
        scratch_shapes=[
            pltpu.VMEM((h + 2, w + 2, cin), jnp.float32),   # padded input
            pltpu.VMEM((m, cin), pw_dtype),                 # depthwise output
        ],
        compiler_params=pltpu.CompilerParams(
            dimension_semantics=("parallel", "arbitrary", "arbitrary"),
            vmem_limit_bytes=48 * 1024 * 1024),
    )(x_nhwc, dw_w_f, b1.reshape(1, cin), pw_w_f, b2.reshape(1, cout))

    return out.reshape(n, oh, ow, cout)


def depthwise_conv_forward(x_nchw, params, stride=1, pw_dtype=jnp.bfloat16):
    """NCHW-facing wrapper (PyTorch interface parity). In a full network keep
    activations NHWC and call depthwise_conv_forward_nhwc directly."""
    x = jnp.transpose(x_nchw, (0, 2, 3, 1))
    y = depthwise_conv_forward_nhwc(x, params, stride=stride,
                                    pw_dtype=pw_dtype)
    return jnp.transpose(y, (0, 3, 1, 2))


# ----------------------------------------------------------------------------
# Pure-JAX reference (correctness check only).
# ----------------------------------------------------------------------------
def reference_forward(x_nchw, params, stride=1):
    dw_w = params["dw_w"]
    pw_w = params["pw_w"]
    s1, b1 = _fold_bn(*params["bn1"])
    s2, b2 = _fold_bn(*params["bn2"])
    cin = dw_w.shape[-1]

    w_oihw = jnp.transpose(dw_w, (2, 0, 1))[:, None, :, :]   # (C,1,3,3)
    y = lax.conv_general_dilated(
        x_nchw, w_oihw, window_strides=(stride, stride),
        padding=((1, 1), (1, 1)), feature_group_count=cin,
        dimension_numbers=("NCHW", "OIHW", "NCHW"))
    y = y * s1[None, :, None, None] + b1[None, :, None, None]
    y = jnp.maximum(y, 0.0)
    y2 = jnp.einsum("nchw,co->nohw", y, pw_w)
    y2 = y2 * s2[None, :, None, None] + b2[None, :, None, None]
    return jnp.maximum(y2, 0.0)


def make_params(key, cin, cout):
    ks = jax.random.split(key, 8)
    dw_w = 0.1 * jax.random.normal(ks[0], (3, 3, cin), jnp.float32)
    pw_w = 0.1 * jax.random.normal(ks[1], (cin, cout), jnp.float32)
    bn1 = (1.0 + 0.1 * jax.random.normal(ks[2], (cin,), jnp.float32),   # gamma
           0.1 * jax.random.normal(ks[3], (cin,), jnp.float32),         # beta
           0.05 * jax.random.normal(ks[4], (cin,), jnp.float32),        # mean
           jax.random.uniform(ks[5], (cin,), jnp.float32, 0.5, 1.5))    # var
    bn2 = (1.0 + 0.1 * jax.random.normal(ks[6], (cout,), jnp.float32),
           0.1 * jax.random.normal(ks[7], (cout,), jnp.float32),
           jnp.zeros((cout,), jnp.float32),
           jnp.ones((cout,), jnp.float32))
    return {"dw_w": dw_w, "pw_w": pw_w, "bn1": bn1, "bn2": bn2}


if __name__ == "__main__":
    # Small shapes: batch=2, in_channels=4, out_channels=8, spatial=16, stride=1.
    key = jax.random.PRNGKey(0)
    k_x, k_p = jax.random.split(key)
    N, CIN, COUT, H, W, STRIDE = 2, 4, 8, 16, 16, 1

    x = jax.random.normal(k_x, (N, CIN, H, W), jnp.float32)
    params = make_params(k_p, CIN, COUT)

    ref = reference_forward(x, params, stride=STRIDE)

    # Exact path: f32 pointwise matmul — tight tolerance vs. f32 reference.
    out_f32 = depthwise_conv_forward(x, params, stride=STRIDE,
                                     pw_dtype=jnp.float32)
    out_f32 = jax.block_until_ready(out_f32)
    assert out_f32.shape == ref.shape, (out_f32.shape, ref.shape)
    assert jnp.allclose(out_f32, ref, atol=1e-4, rtol=1e-4), (
        float(jnp.max(jnp.abs(out_f32 - ref))))

    # Default fast path: bf16 MXU pointwise — relaxed tolerance.
    out = depthwise_conv_forward(x, params, stride=STRIDE)
    out = jax.block_until_ready(out)
    assert out.shape == ref.shape, (out.shape, ref.shape)
    assert jnp.allclose(out, ref, atol=3e-2, rtol=3e-2), (
        float(jnp.max(jnp.abs(out - ref))))

    print("KERNEL_OK")
</pallas_src>

<mosaic_0001>
module attributes {stable_mosaic.version = 11 : i64} {
  func.func @_fused_dw_pw_kernel(%arg0: i32, %arg1: i32, %arg2: i32, %arg3: memref<1x16x16x4xf32, #tpu.memory_space<vmem>>, %arg4: memref<3x3x4xf32, #tpu.memory_space<vmem>>, %arg5: memref<1x4xf32, #tpu.memory_space<vmem>>, %arg6: memref<4x8xf32, #tpu.memory_space<vmem>>, %arg7: memref<1x8xf32, #tpu.memory_space<vmem>>, %arg8: memref<1x256x8xf32, #tpu.memory_space<vmem>>, %arg9: memref<18x18x4xf32, #tpu.memory_space<vmem>>, %arg10: memref<256x4xf32, #tpu.memory_space<vmem>>) attributes {dimension_semantics = [#tpu.dimension_semantics<parallel>, #tpu.dimension_semantics<arbitrary>, #tpu.dimension_semantics<arbitrary>], iteration_bounds = array<i64: 2, 1, 1>, scalar_prefetch = 0 : i64, scratch_operands = 2 : i64, tpu.core_type = #tpu.core_type<tc>, window_params = [{transform_indices = @transform_0, window_bounds = array<i64: 1, 16, 16, 4>}, {pipeline_mode = #tpu.pipeline_mode<synchronous>, transform_indices = @transform_1, window_bounds = array<i64: 3, 3, 4>}, {pipeline_mode = #tpu.pipeline_mode<synchronous>, transform_indices = @transform_2, window_bounds = array<i64: 1, 4>}, {transform_indices = @transform_3, window_bounds = array<i64: 4, 8>}, {transform_indices = @transform_4, window_bounds = array<i64: 1, 8>}, {transform_indices = @transform_5, window_bounds = array<i64: 1, 256, 8>}]} {
    %c0_i32 = arith.constant 0 : i32
    %0 = arith.cmpi eq, %arg1, %c0_i32 : i32
    %c0_i32_0 = arith.constant 0 : i32
    %1 = arith.cmpi eq, %arg2, %c0_i32_0 : i32
    %2 = arith.andi %0, %1 : i1
    %3 = arith.extui %2 : i1 to i32
    %c0_i32_1 = arith.constant 0 : i32
    %4 = arith.cmpi ne, %3, %c0_i32_1 : i32
    scf.if %4 {
      %cst_10 = arith.constant 0.000000e+00 : f32
      %19 = vector.broadcast %cst_10 : f32 to vector<18x18x4xf32>
      %c0_11 = arith.constant 0 : index
      %c0_12 = arith.constant 0 : index
      %c0_13 = arith.constant 0 : index
      %20 = vector.load %arg9[%c0_11, %c0_12, %c0_13] : memref<18x18x4xf32, #tpu.memory_space<vmem>>, vector<18x18x4xf32>
      tpu.vector_store %arg9[%c0_11, %c0_12, %c0_13], %19 {strides = array<i32>} : memref<18x18x4xf32, #tpu.memory_space<vmem>>, vector<18x18x4xf32>,
      %c0_14 = arith.constant 0 : index
      %c0_15 = arith.constant 0 : index
      %c0_16 = arith.constant 0 : index
      %c0_17 = arith.constant 0 : index
      %21 = vector.load %arg3[%c0_14, %c0_15, %c0_16, %c0_17] : memref<1x16x16x4xf32, #tpu.memory_space<vmem>>, vector<1x16x16x4xf32>
      %22 = vector.shape_cast %21 : vector<1x16x16x4xf32> to vector<16x16x4xf32>
      %c1 = arith.constant 1 : index
      %c1_18 = arith.constant 1 : index
      %c0_19 = arith.constant 0 : index
      %23 = vector.load %arg9[%c1, %c1_18, %c0_19] : memref<18x18x4xf32, #tpu.memory_space<vmem>>, vector<16x16x4xf32>
      tpu.vector_store %arg9[%c1, %c1_18, %c0_19], %22 {strides = array<i32>} : memref<18x18x4xf32, #tpu.memory_space<vmem>>, vector<16x16x4xf32>,
      %cst_20 = arith.constant 0.000000e+00 : f32
      %24 = vector.broadcast %cst_20 : f32 to vector<16x16x4xf32>
      %c0_21 = arith.constant 0 : index
      %c0_22 = arith.constant 0 : index
      %c0_23 = arith.constant 0 : index
      %25 = vector.load %arg9[%c0_21, %c0_22, %c0_23] : memref<18x18x4xf32, #tpu.memory_space<vmem>>, vector<16x16x4xf32>
      %c0_24 = arith.constant 0 : index
      %c0_25 = arith.constant 0 : index
      %c0_26 = arith.constant 0 : index
      %26 = vector.load %arg4[%c0_24, %c0_25, %c0_26] : memref<3x3x4xf32, #tpu.memory_space<vmem>>, vector<1x1x4xf32>
      %27 = vector.shape_cast %26 : vector<1x1x4xf32> to vector<4xf32>
      %28 = vector.shape_cast %27 : vector<4xf32> to vector<1x1x4xf32>
      %29 = vector.broadcast %28 : vector<1x1x4xf32> to vector<16x16x4xf32>
      %30 = arith.mulf %25, %29 : vector<16x16x4xf32>
      %31 = arith.addf %24, %30 : vector<16x16x4xf32>
      %c0_27 = arith.constant 0 : index
      %c1_28 = arith.constant 1 : index
      %c0_29 = arith.constant 0 : index
      %32 = vector.load %arg9[%c0_27, %c1_28, %c0_29] : memref<18x18x4xf32, #tpu.memory_space<vmem>>, vector<16x16x4xf32>
      %c0_30 = arith.constant 0 : index
      %c1_31 = arith.constant 1 : index
      %c0_32 = arith.constant 0 : index
      %33 = vector.load %arg4[%c0_30, %c1_31, %c0_32] : memref<3x3x4xf32, #tpu.memory_space<vmem>>, vector<1x1x4xf32>
      %34 = vector.shape_cast %33 : vector<1x1x4xf32> to vector<4xf32>
      %35 = vector.shape_cast %34 : vector<4xf32> to vector<1x1x4xf32>
      %36 = vector.broadcast %35 : vector<1x1x4xf32> to vector<16x16x4xf32>
      %37 = arith.mulf %32, %36 : vector<16x16x4xf32>
      %38 = arith.addf %31, %37 : vector<16x16x4xf32>
      %c0_33 = arith.constant 0 : index
      %c2 = arith.constant 2 : index
      %c0_34 = arith.constant 0 : index
      %39 = vector.load %arg9[%c0_33, %c2, %c0_34] : memref<18x18x4xf32, #tpu.memory_space<vmem>>, vector<16x16x4xf32>
      %c0_35 = arith.constant 0 : index
      %c2_36 = arith.constant 2 : index
      %c0_37 = arith.constant 0 : index
      %40 = vector.load %arg4[%c0_35, %c2_36, %c0_37] : memref<3x3x4xf32, #tpu.memory_space<vmem>>, vector<1x1x4xf32>
      %41 = vector.shape_cast %40 : vector<1x1x4xf32> to vector<4xf32>
      %42 = vector.shape_cast %41 : vector<4xf32> to vector<1x1x4xf32>
      %43 = vector.broadcast %42 : vector<1x1x4xf32> to vector<16x16x4xf32>
      %44 = arith.mulf %39, %43 : vector<16x16x4xf32>
      %45 = arith.addf %38, %44 : vector<16x16x4xf32>
      %c1_38 = arith.constant 1 : index
      %c0_39 = arith.constant 0 : index
      %c0_40 = arith.constant 0 : index
      %46 = vector.load %arg9[%c1_38, %c0_39, %c0_40] : memref<18x18x4xf32, #tpu.memory_space<vmem>>, vector<16x16x4xf32>
      %c1_41 = arith.constant 1 : index
      %c0_42 = arith.constant 0 : index
      %c0_43 = arith.constant 0 : index
      %47 = vector.load %arg4[%c1_41, %c0_42, %c0_43] : memref<3x3x4xf32, #tpu.memory_space<vmem>>, vector<1x1x4xf32>
      %48 = vector.shape_cast %47 : vector<1x1x4xf32> to vector<4xf32>
      %49 = vector.shape_cast %48 : vector<4xf32> to vector<1x1x4xf32>
      %50 = vector.broadcast %49 : vector<1x1x4xf32> to vector<16x16x4xf32>
      %51 = arith.mulf %46, %50 : vector<16x16x4xf32>
      %52 = arith.addf %45, %51 : vector<16x16x4xf32>
      %c1_44 = arith.constant 1 : index
      %c1_45 = arith.constant 1 : index
      %c0_46 = arith.constant 0 : index
      %53 = vector.load %arg9[%c1_44, %c1_45, %c0_46] : memref<18x18x4xf32, #tpu.memory_space<vmem>>, vector<16x16x4xf32>
      %c1_47 = arith.constant 1 : index
      %c1_48 = arith.constant 1 : index
      %c0_49 = arith.constant 0 : index
      %54 = vector.load %arg4[%c1_47, %c1_48, %c0_49] : memref<3x3x4xf32, #tpu.memory_space<vmem>>, vector<1x1x4xf32>
      %55 = vector.shape_cast %54 : vector<1x1x4xf32> to vector<4xf32>
      %56 = vector.shape_cast %55 : vector<4xf32> to vector<1x1x4xf32>
      %57 = vector.broadcast %56 : vector<1x1x4xf32> to vector<16x16x4xf32>
      %58 = arith.mulf %53, %57 : vector<16x16x4xf32>
      %59 = arith.addf %52, %58 : vector<16x16x4xf32>
      %c1_50 = arith.constant 1 : index
      %c2_51 = arith.constant 2 : index
      %c0_52 = arith.constant 0 : index
      %60 = vector.load %arg9[%c1_50, %c2_51, %c0_52] : memref<18x18x4xf32, #tpu.memory_space<vmem>>, vector<16x16x4xf32>
      %c1_53 = arith.constant 1 : index
      %c2_54 = arith.constant 2 : index
      %c0_55 = arith.constant 0 : index
      %61 = vector.load %arg4[%c1_53, %c2_54, %c0_55] : memref<3x3x4xf32, #tpu.memory_space<vmem>>, vector<1x1x4xf32>
      %62 = vector.shape_cast %61 : vector<1x1x4xf32> to vector<4xf32>
      %63 = vector.shape_cast %62 : vector<4xf32> to vector<1x1x4xf32>
      %64 = vector.broadcast %63 : vector<1x1x4xf32> to vector<16x16x4xf32>
      %65 = arith.mulf %60, %64 : vector<16x16x4xf32>
      %66 = arith.addf %59, %65 : vector<16x16x4xf32>
      %c2_56 = arith.constant 2 : index
      %c0_57 = arith.constant 0 : index
      %c0_58 = arith.constant 0 : index
      %67 = vector.load %arg9[%c2_56, %c0_57, %c0_58] : memref<18x18x4xf32, #tpu.memory_space<vmem>>, vector<16x16x4xf32>
      %c2_59 = arith.constant 2 : index
      %c0_60 = arith.constant 0 : index
      %c0_61 = arith.constant 0 : index
      %68 = vector.load %arg4[%c2_59, %c0_60, %c0_61] : memref<3x3x4xf32, #tpu.memory_space<vmem>>, vector<1x1x4xf32>
      %69 = vector.shape_cast %68 : vector<1x1x4xf32> to vector<4xf32>
      %70 = vector.shape_cast %69 : vector<4xf32> to vector<1x1x4xf32>
      %71 = vector.broadcast %70 : vector<1x1x4xf32> to vector<16x16x4xf32>
      %72 = arith.mulf %67, %71 : vector<16x16x4xf32>
      %73 = arith.addf %66, %72 : vector<16x16x4xf32>
      %c2_62 = arith.constant 2 : index
      %c1_63 = arith.constant 1 : index
      %c0_64 = arith.constant 0 : index
      %74 = vector.load %arg9[%c2_62, %c1_63, %c0_64] : memref<18x18x4xf32, #tpu.memory_space<vmem>>, vector<16x16x4xf32>
      %c2_65 = arith.constant 2 : index
      %c1_66 = arith.constant 1 : index
      %c0_67 = arith.constant 0 : index
      %75 = vector.load %arg4[%c2_65, %c1_66, %c0_67] : memref<3x3x4xf32, #tpu.memory_space<vmem>>, vector<1x1x4xf32>
      %76 = vector.shape_cast %75 : vector<1x1x4xf32> to vector<4xf32>
      %77 = vector.shape_cast %76 : vector<4xf32> to vector<1x1x4xf32>
      %78 = vector.broadcast %77 : vector<1x1x4xf32> to vector<16x16x4xf32>
      %79 = arith.mulf %74, %78 : vector<16x16x4xf32>
      %80 = arith.addf %73, %79 : vector<16x16x4xf32>
      %c2_68 = arith.constant 2 : index
      %c2_69 = arith.constant 2 : index
      %c0_70 = arith.constant 0 : index
      %81 = vector.load %arg9[%c2_68, %c2_69, %c0_70] : memref<18x18x4xf32, #tpu.memory_space<vmem>>, vector<16x16x4xf32>
      %c2_71 = arith.constant 2 : index
      %c2_72 = arith.constant 2 : index
      %c0_73 = arith.constant 0 : index
      %82 = vector.load %arg4[%c2_71, %c2_72, %c0_73] : memref<3x3x4xf32, #tpu.memory_space<vmem>>, vector<1x1x4xf32>
      %83 = vector.shape_cast %82 : vector<1x1x4xf32> to vector<4xf32>
      %84 = vector.shape_cast %83 : vector<4xf32> to vector<1x1x4xf32>
      %85 = vector.broadcast %84 : vector<1x1x4xf32> to vector<16x16x4xf32>
      %86 = arith.mulf %81, %85 : vector<16x16x4xf32>
      %87 = arith.addf %80, %86 : vector<16x16x4xf32>
      %c0_74 = arith.constant 0 : index
      %c0_75 = arith.constant 0 : index
      %88 = vector.load %arg5[%c0_74, %c0_75] : memref<1x4xf32, #tpu.memory_space<vmem>>, vector<1x4xf32>
      %89 = vector.shape_cast %88 : vector<1x4xf32> to vector<4xf32>
      %90 = vector.shape_cast %89 : vector<4xf32> to vector<1x1x4xf32>
      %91 = vector.broadcast %90 : vector<1x1x4xf32> to vector<16x16x4xf32>
      %92 = arith.addf %87, %91 : vector<16x16x4xf32>
      %cst_76 = arith.constant 0.000000e+00 : f32
      %93 = vector.broadcast %cst_76 : f32 to vector<16x16x4xf32>
      %94 = arith.maximumf %92, %93 : vector<16x16x4xf32>
      %95 = vector.shape_cast %94 : vector<16x16x4xf32> to vector<256x4xf32>
      %c0_77 = arith.constant 0 : index
      %c0_78 = arith.constant 0 : index
      %96 = vector.load %arg10[%c0_77, %c0_78] : memref<256x4xf32, #tpu.memory_space<vmem>>, vector<256x4xf32>
      tpu.vector_store %arg10[%c0_77, %c0_78], %95 {strides = array<i32>} : memref<256x4xf32, #tpu.memory_space<vmem>>, vector<256x4xf32>,
    } else {
    }
    %c256_i32 = arith.constant 256 : i32
    %5 = arith.muli %arg1, %c256_i32 : i32
    %6 = tpu.assume_multiple %5, 256 : i32
    %7 = arith.index_cast %6 : i32 to index
    %c0 = arith.constant 0 : index
    %8 = vector.load %arg10[%7, %c0] : memref<256x4xf32, #tpu.memory_space<vmem>>, vector<256x4xf32>
    %c0_2 = arith.constant 0 : index
    %c0_3 = arith.constant 0 : index
    %9 = vector.load %arg6[%c0_2, %c0_3] : memref<4x8xf32, #tpu.memory_space<vmem>>, vector<4x8xf32>
    %cst = arith.constant dense<0.000000e+00> : vector<256x8xf32>
    %10 = tpu.matmul %8, %9, %cst {dimension_numbers = #tpu.dot_dimension_numbers<[1], [0], [0], [1], [0, 0, 1, 1], [], []>} : vector<256x4xf32>, vector<4x8xf32>, vector<256x8xf32> -> vector<256x8xf32>
    %c0_4 = arith.constant 0 : index
    %c0_5 = arith.constant 0 : index
    %11 = vector.load %arg7[%c0_4, %c0_5] : memref<1x8xf32, #tpu.memory_space<vmem>>, vector<1x8xf32>
    %12 = vector.broadcast %11 : vector<1x8xf32> to vector<256x8xf32>
    %13 = arith.addf %10, %12 : vector<256x8xf32>
    %cst_6 = arith.constant 0.000000e+00 : f32
    %14 = vector.broadcast %cst_6 : f32 to vector<256x8xf32>
    %15 = arith.maximumf %13, %14 : vector<256x8xf32>
    %c0_7 = arith.constant 0 : index
    %c0_8 = arith.constant 0 : index
    %c0_9 = arith.constant 0 : index
    %16 = vector.load %arg8[%c0_7, %c0_8, %c0_9] : memref<1x256x8xf32, #tpu.memory_space<vmem>>, vector<1x256x8xf32>
    %17 = vector.shape_cast %16 : vector<1x256x8xf32> to vector<256x8xf32>
    %18 = vector.shape_cast %15 : vector<256x8xf32> to vector<1x256x8xf32>
    tpu.vector_store %arg8[%c0_7, %c0_8, %c0_9], %18 {strides = array<i32>} : memref<1x256x8xf32, #tpu.memory_space<vmem>>, vector<1x256x8xf32>,
    return
  }
  func.func @transform_0(%arg0: i32, %arg1: i32, %arg2: i32) -> (i32, i32, i32, i32) {
    %c0_i32 = arith.constant 0 : i32
    %c0_i32_0 = arith.constant 0 : i32
    %c0_i32_1 = arith.constant 0 : i32
    %c0_i32_2 = arith.constant 0 : i32
    return %arg0, %c0_i32, %c0_i32_0, %c0_i32_1 : i32, i32, i32, i32
  }
  func.func @transform_1(%arg0: i32, %arg1: i32, %arg2: i32) -> (i32, i32, i32) {
    %c0_i32 = arith.constant 0 : i32
    %c0_i32_0 = arith.constant 0 : i32
    %c0_i32_1 = arith.constant 0 : i32
    %c0_i32_2 = arith.constant 0 : i32
    return %c0_i32, %c0_i32_0, %c0_i32_1 : i32, i32, i32
  }
  func.func @transform_2(%arg0: i32, %arg1: i32, %arg2: i32) -> (i32, i32) {
    %c0_i32 = arith.constant 0 : i32
    %c0_i32_0 = arith.constant 0 : i32
    %c0_i32_1 = arith.constant 0 : i32
    return %c0_i32, %c0_i32_0 : i32, i32
  }
  func.func @transform_3(%arg0: i32, %arg1: i32, %arg2: i32) -> (i32, i32) {
    %c0_i32 = arith.constant 0 : i32
    %c0_i32_0 = arith.constant 0 : i32
    return %c0_i32, %arg2 : i32, i32
  }
  func.func @transform_4(%arg0: i32, %arg1: i32, %arg2: i32) -> (i32, i32) {
    %c0_i32 = arith.constant 0 : i32
    %c0_i32_0 = arith.constant 0 : i32
    return %c0_i32, %arg2 : i32, i32
  }
  func.func @transform_5(%arg0: i32, %arg1: i32, %arg2: i32) -> (i32, i32, i32) {
    %c0_i32 = arith.constant 0 : i32
    return %arg0, %arg1, %arg2 : i32, i32, i32
  }
}

</mosaic_0001>

<llo_original>
// kernel: tpu_custom_call.1
$region0: #{tpu_custom_call.1}
  #allocation0 [shape = 'u32[]', space=smem, size = 0x4, offset = 0x4, fixed_abs, tag = 'smem constant byte address 0x4 - core index']
  #allocation1 [shape = 'u32[72,128]{1,0:T(1,128)}', space=vmem, size = 0x9000, scoped, tag = 'internal scratch']
  #allocation2 [shape = 'f32[18,18,4]{2,1,0:T(8,128)}', space=vmem, size = 0x36000, scoped, tag = 'scratch operand']
  #allocation3 [shape = 'f32[256,4]{1,0:T(8,128)}', space=vmem, size = 0x20000, scoped, tag = 'scratch operand']
  %s0 = inlined_call_operand.vmem [shape: f32[2,16,16,4], index: 0, kind: input, shape index: {}]
  %s1 = inlined_call_operand.vmem [shape: f32[3,3,4], index: 1, kind: input, shape index: {}]
  %s2 = inlined_call_operand.vmem [shape: f32[1,4], index: 2, kind: input, shape index: {}]
  %s3 = inlined_call_operand.vmem [shape: f32[4,8], index: 3, kind: input, shape index: {}]
  %s4 = inlined_call_operand.vmem [shape: f32[1,8], index: 4, kind: input, shape index: {}]
  %s5 = inlined_call_operand.vmem [shape: f32[2,256,8], index: 5, kind: output, shape index: {}]
  %s6 = sld [smem:[#allocation0]]
  $region57: #{tpu_custom_call.1} parent=0
    _
  %s8 = ssub.s32 1, %s6
  %s9 = scalar_select 0, %s8, %s6
  loop: start=0, step=1, limit=4
  $region2: #{tpu_custom_call.1} parent=0 // loop_pre_header
    _
  $region3: #{tpu_custom_call.1} parent=0 // loop_header
    %s11 = sphi 0, %s15
    %p12 = scmp.ge.s32.totalorder %s11, 4
    %s18 = sphi 0, %s37
    %s19 = sphi 0, %s33
    %s20 = sphi 0, %s29
    %s21 = sphi 0, %s18
    %s22 = sphi 0, %s19
    %s23 = sphi 0, %s20
    %s24 = sphi 0, %s21
    %s25 = sphi 0, %s22
    %s26 = sphi 0, %s23
    %s40 = sphi 0, %s42
    %s43 = sphi 0, %s40
    %s44 = sphi 0, %s43
    %s60 = sphi 0, %s44
    %s64 = sphi 0, %s64
    %s66 = sphi 0, %s64
    %s67 = sphi 0, %s66
    %s81 = sphi 0, %s67
    %s85 = sphi 0, %s85
    %s87 = sphi 0, %s85
    %s88 = sphi 0, %s87
    %s102 = sphi 0, %s88
    %s108 = sphi 0, %s110
    %s111 = sphi 0, %s108
    %s112 = sphi 0, %s111
    %s128 = sphi 0, %s112
    %s134 = sphi 0, %s136
    %s137 = sphi 0, %s134
    %s138 = sphi 0, %s137
    %s154 = sphi 0, %s138
    %s164 = sphi 0, %s166
    %s167 = sphi 0, %s164
    %s168 = sphi 0, %s167
    %s184 = sphi 0, %s168
  $region4: #{tpu_custom_call.1} parent=0 // loop_header_branch
    %14 = sbr.rel (%p12) target = $region8
  $region5: #{tpu_custom_call.1} parent=0 // loop_body
    %s16 = ssub.s32 %s11, 1
    %s17 = ssub.s32 %s11, 2
    %s27 = sadd.s32 1, %s20
    %p28 = scmp.ge.s32.totalorder %s27, 1
    %s29 = scalar_select %p28, 0, %s27
    %s30 = sadd.s32 1, %s19
    %s31 = scalar_select %p28, %s30, %s19
    %p32 = scmp.ge.s32.totalorder %s31, 1
    %s33 = scalar_select %p32, 0, %s31
    %s34 = sadd.s32 1, %s18
    %s35 = scalar_select %p32, %s34, %s18
    %p36 = scmp.ge.s32.totalorder %s35, 2
    %s37 = scalar_select %p36, 0, %s35
    %s38 = ssub.s32 %s18, %s37
    %p39 = scmp.eq.s32.totalorder %s38, 0
    %s41 = sadd.s32 %s40, 1
    %s42 = scalar_select %p39, %s40, %s41
    %p45 = pneg %p39
    %p46 = scmp.eq.s32.totalorder %s11, 1
    %p47 = por %p45, %p46
    %p48 = scmp.ne.s32.totalorder %s40, %s43
    %p49 = scmp.eq.s32.totalorder %s11, 0
    %p50 = por %p48, %p49
    %p51 = scmp.ne.s32.totalorder %s40, %s43
    %p52 = scmp.eq.s32.totalorder %s16, 1
    %p53 = por %p51, %p52
    %p54 = scmp.ne.s32.totalorder %s43, %s44
    %p55 = scmp.eq.s32.totalorder %s16, 0
    %p56 = por %p54, %p55
    %p57 = scmp.ne.s32.totalorder %s43, %s44
    %p58 = scmp.eq.s32.totalorder %s17, 1
    %p59 = por %p57, %p58
    %p61 = scmp.ne.s32.totalorder %s44, %s60
    %p62 = scmp.eq.s32.totalorder %s17, 0
    %p63 = por %p61, %p62
    %s65 = sadd.s32 %s64, 1
    %p68 = scmp.eq.s32.totalorder %s11, 1
    %p69 = scmp.ne.s32.totalorder %s64, %s66
    %p70 = scmp.eq.s32.totalorder %s11, 0
    %p71 = por %p69, %p70
    %p72 = scmp.ne.s32.totalorder %s64, %s66
    %p73 = scmp.eq.s32.totalorder %s16, 1
    %p74 = por %p72, %p73
    %p75 = scmp.ne.s32.totalorder %s66, %s67
    %p76 = scmp.eq.s32.totalorder %s16, 0
    %p77 = por %p75, %p76
    %p78 = scmp.ne.s32.totalorder %s66, %s67
    %p79 = scmp.eq.s32.totalorder %s17, 1
    %p80 = por %p78, %p79
    %p82 = scmp.ne.s32.totalorder %s67, %s81
    %p83 = scmp.eq.s32.totalorder %s17, 0
    %p84 = por %p82, %p83
    %s86 = sadd.s32 %s85, 1
    %p89 = scmp.eq.s32.totalorder %s11, 1
    %p90 = scmp.ne.s32.totalorder %s85, %s87
    %p91 = scmp.eq.s32.totalorder %s11, 0
    %p92 = por %p90, %p91
    %p93 = scmp.ne.s32.totalorder %s85, %s87
    %p94 = scmp.eq.s32.totalorder %s16, 1
    %p95 = por %p93, %p94
    %p96 = scmp.ne.s32.totalorder %s87, %s88
    %p97 = scmp.eq.s32.totalorder %s16, 0
    %p98 = por %p96, %p97
    %p99 = scmp.ne.s32.totalorder %s87, %s88
    %p100 = scmp.eq.s32.totalorder %s17, 1
    %p101 = por %p99, %p100
    %p103 = scmp.ne.s32.totalorder %s88, %s102
    %p104 = scmp.eq.s32.totalorder %s17, 0
    %p105 = por %p103, %p104
    %s106 = ssub.s32 %s20, %s29
    %p107 = scmp.eq.s32.totalorder %s106, 0
    %s109 = sadd.s32 %s108, 1
    %s110 = scalar_select %p107, %s108, %s109
    %p113 = pneg %p107
    %p114 = scmp.eq.s32.totalorder %s11, 1
    %p115 = por %p113, %p114
    %p116 = scmp.ne.s32.totalorder %s108, %s111
    %p117 = scmp.eq.s32.totalorder %s11, 0
    %p118 = por %p116, %p117
    %p119 = scmp.ne.s32.totalorder %s108, %s111
    %p120 = scmp.eq.s32.totalorder %s16, 1
    %p121 = por %p119, %p120
    %p122 = scmp.ne.s32.totalorder %s111, %s112
    %p123 = scmp.eq.s32.totalorder %s16, 0
    %p124 = por %p122, %p123
    %p125 = scmp.ne.s32.totalorder %s111, %s112
    %p126 = scmp.eq.s32.totalorder %s17, 1
    %p127 = por %p125, %p126
    %p129 = scmp.ne.s32.totalorder %s112, %s128
    %p130 = scmp.eq.s32.totalorder %s17, 0
    %p131 = por %p129, %p130
    %s132 = ssub.s32 %s20, %s29
    %p133 = scmp.eq.s32.totalorder %s132, 0
    %s135 = sadd.s32 %s134, 1
    %s136 = scalar_select %p133, %s134, %s135
    %p139 = pneg %p133
    %p140 = scmp.eq.s32.totalorder %s11, 1
    %p141 = por %p139, %p140
    %p142 = scmp.ne.s32.totalorder %s134, %s137
    %p143 = scmp.eq.s32.totalorder %s11, 0
    %p144 = por %p142, %p143
    %p145 = scmp.ne.s32.totalorder %s134, %s137
    %p146 = scmp.eq.s32.totalorder %s16, 1
    %p147 = por %p145, %p146
    %p148 = scmp.ne.s32.totalorder %s137, %s138
    %p149 = scmp.eq.s32.totalorder %s16, 0
    %p150 = por %p148, %p149
    %p151 = scmp.ne.s32.totalorder %s137, %s138
    %p152 = scmp.eq.s32.totalorder %s17, 1
    %p153 = por %p151, %p152
    %p155 = scmp.ne.s32.totalorder %s138, %s154
    %p156 = scmp.eq.s32.totalorder %s17, 0
    %p157 = por %p155, %p156
    %s158 = ssub.s32 %s18, %s37
    %s159 = ssub.s32 %s19, %s33
    %s160 = sor.u32 %s158, %s159
    %s161 = ssub.s32 %s20, %s29
    %s162 = sor.u32 %s160, %s161
    %p163 = scmp.eq.s32.totalorder %s162, 0
    %s165 = sadd.s32 %s164, 1
    %s166 = scalar_select %p163, %s164, %s165
    %p169 = pneg %p163
    %p170 = scmp.eq.s32.totalorder %s11, 1
    %p171 = por %p169, %p170
    %p172 = scmp.ne.s32.totalorder %s164, %s167
    %p173 = scmp.eq.s32.totalorder %s11, 0
    %p174 = por %p172, %p173
    %p175 = scmp.ne.s32.totalorder %s164, %s167
    %p176 = scmp.eq.s32.totalorder %s16, 1
    %p177 = por %p175, %p176
    %p178 = scmp.ne.s32.totalorder %s167, %s168
    %p179 = scmp.eq.s32.totalorder %s16, 0
    %p180 = por %p178, %p179
    %p181 = scmp.ne.s32.totalorder %s167, %s168
    %p182 = scmp.eq.s32.totalorder %s17, 1
    %p183 = por %p181, %p182
    %p185 = scmp.ne.s32.totalorder %s168, %s184
    %p186 = scmp.eq.s32.totalorder %s17, 0
    %p187 = por %p185, %p186
    %p188 = scmp.le.s32.totalorder 1, %s11
    %p189 = scmp.lt.s32.totalorder %s11, 3
    %p190 = pnand %p188, %p189
    %p191 = pneg %p190
    // Predicated region
    $region9: #{tpu_custom_call.1} parent=5 // pred_check
      _
    $region10: #{tpu_custom_call.1} parent=5 // pred_check_branch
      %193 = sbr.rel (%p190) target = $region12
    $region11: #{tpu_custom_call.1} parent=5 // pred_region
      %s194 = ssub.s32 %s11, 1
      // Predicated region
      $region13: #{tpu_custom_call.1} parent=11 // pred_check
        %p195 = pneg %p77
      $region14: #{tpu_custom_call.1} parent=11 // pred_check_branch
        %197 = sbr.rel (%p195) target = $region16
      $region15: #{tpu_custom_call.1} parent=11 // pred_region
        _
      $region16: #{tpu_custom_call.1} parent=11 // pred_fallthru
        _
      // Predicated region
      $region17: #{tpu_custom_call.1} parent=11 // pred_check
        %p198 = pneg %p98
      $region18: #{tpu_custom_call.1} parent=11 // pred_check_branch
        %200 = sbr.rel (%p198) target = $region20
      $region19: #{tpu_custom_call.1} parent=11 // pred_region
        _
      $region20: #{tpu_custom_call.1} parent=11 // pred_fallthru
        _
      // Predicated region
      $region21: #{tpu_custom_call.1} parent=11 // pred_check
        %p201 = pneg %p124
      $region22: #{tpu_custom_call.1} parent=11 // pred_check_branch
        %203 = sbr.rel (%p201) target = $region24
      $region23: #{tpu_custom_call.1} parent=11 // pred_region
        %p204 = scmp.lt.s32.totalorder %s23, 0
        %s205 = scalar_select %p204, %s23, 0
        %s206 = smul.addr %s205, 4
        %s207 = scalar_lea.vmem %s3, %s206
      $region24: #{tpu_custom_call.1} parent=11 // pred_fallthru
        _
      // Predicated region
      $region25: #{tpu_custom_call.1} parent=11 // pred_check
        %p208 = pneg %p150
      $region26: #{tpu_custom_call.1} parent=11 // pred_check_branch
        %210 = sbr.rel (%p208) target = $region28
      $region27: #{tpu_custom_call.1} parent=11 // pred_region
        %p211 = scmp.lt.s32.totalorder %s23, 0
        %s212 = scalar_select %p211, %s23, 0
        %s213 = scalar_lea.vmem %s4, %s212
      $region28: #{tpu_custom_call.1} parent=11 // pred_fallthru
        _
    $region12: #{tpu_custom_call.1} parent=5 // pred_fallthru
      _
    %p214 = scmp.lt.s32.totalorder %s11, 2
    // Predicated region
    $region29: #{tpu_custom_call.1} parent=5 // pred_check
      %p215 = pneg %p214
    $region30: #{tpu_custom_call.1} parent=5 // pred_check_branch
      %217 = sbr.rel (%p215) target = $region32
    $region31: #{tpu_custom_call.1} parent=5 // pred_region
      // Predicated region
      $region33: #{tpu_custom_call.1} parent=31 // pred_check
        %p218 = pneg %p50
      $region34: #{tpu_custom_call.1} parent=31 // pred_check_branch
        %220 = sbr.rel (%p218) target = $region36
      $region35: #{tpu_custom_call.1} parent=31 // pred_region
        %p221 = scmp.lt.s32.totalorder %s18, 1
        %s222 = scalar_select %p221, %s18, 1
        %s223 = smul.addr %s222, 32
        %s224 = smul.addr %s223, 8
        %s225 = scalar_lea.vmem %s0, %s224
      $region36: #{tpu_custom_call.1} parent=31 // pred_fallthru
        _
    $region32: #{tpu_custom_call.1} parent=5 // pred_fallthru
      _
    %p226 = scmp.le.s32.totalorder 1, %s11
    %p227 = scmp.lt.s32.totalorder %s11, 3
    %p228 = pnand %p226, %p227
    %p229 = pneg %p228
    // Predicated region
    $region37: #{tpu_custom_call.1} parent=5 // pred_check
      _
    $region38: #{tpu_custom_call.1} parent=5 // pred_check_branch
      %231 = sbr.rel (%p228) target = $region40
    $region39: #{tpu_custom_call.1} parent=5 // pred_region
      %s232 = ssub.s32 %s11, 1
      %p233 = scmp.lt.s32.totalorder %s21, 1
      %s234 = scalar_select %p233, %s21, 1
      %s235 = smul.addr %s234, 32
      %s236 = smul.addr %s235, 8
      %s237 = scalar_lea.vmem %s0, %s236
      %p238 = pneg %p56
      %p239 = pneg %p53
      %p240 = pneg %p77
      %p241 = pneg %p74
      %p242 = pneg %p98
      %p243 = pneg %p95
      %p244 = scmp.lt.s32.totalorder %s23, 0
      %s245 = scalar_select %p244, %s23, 0
      %s246 = smul.addr %s245, 4
      %s247 = scalar_lea.vmem %s3, %s246
      %p248 = pneg %p124
      %p249 = pneg %p121
      %p250 = scmp.lt.s32.totalorder %s23, 0
      %s251 = scalar_select %p250, %s23, 0
      %s252 = scalar_lea.vmem %s4, %s251
      %p253 = pneg %p150
      %p254 = pneg %p147
      %p255 = pneg %p180
      %p256 = pneg %p177
      %s257 = smul.u32 32, %s22
      %p258 = scmp.lt.s32.totalorder %s21, 1
      %s259 = scalar_select %p258, %s21, 1
      %p260 = scmp.lt.s32.totalorder %s257, 31
      %s261 = scalar_select %p260, %s257, 31
      %p262 = scmp.lt.s32.totalorder %s23, 0
      %s263 = scalar_select %p262, %s23, 0
      %s264 = sadd.s32 %s263, %s261
      %s265 = smul.addr %s259, 32
      %s266 = sadd.s32 %s264, %s265
      %s267 = smul.addr %s266, 8
      %s268 = scalar_lea.vmem %s5, %s267
      %p269 = scmp.lt.s32.totalorder %s21, 1
      %s270 = scalar_select %p269, %s21, 1
      %s271 = smul.addr %s270, 32
      %s272 = smul.addr %s271, 8
      %s273 = scalar_lea.vmem %s0, %s272
      %p274 = scmp.lt.s32.totalorder %s23, 0
      %s275 = scalar_select %p274, %s23, 0
      %s276 = smul.addr %s275, 4
      %s277 = scalar_lea.vmem %s3, %s276
      %p278 = scmp.lt.s32.totalorder %s23, 0
      %s279 = scalar_select %p278, %s23, 0
      %s280 = scalar_lea.vmem %s4, %s279
      %s281 = smul.u32 32, %s22
      %p282 = scmp.lt.s32.totalorder %s21, 1
      %s283 = scalar_select %p282, %s21, 1
      %p284 = scmp.lt.s32.totalorder %s281, 31
      %s285 = scalar_select %p284, %s281, 31
      %p286 = scmp.lt.s32.totalorder %s23, 0
      %s287 = scalar_select %p286, %s23, 0
      %s288 = sadd.s32 %s287, %s285
      %s289 = smul.addr %s283, 32
      %s290 = sadd.s32 %s288, %s289
      %s291 = smul.addr %s290, 8
      %s292 = scalar_lea.vmem %s5, %s291
      %s293 = smul.u32 32, %s22
      %p294 = scmp.eq.s32.totalorder %s22, 0
      %p295 = scmp.eq.s32.totalorder %s23, 0
      %p296 = pnand %p294, %p295
      %p297 = pneg %p296
      // Predicated region
      $region41: #{tpu_custom_call.1} parent=39 // pred_check
        _
      $region42: #{tpu_custom_call.1} parent=39 // pred_check_branch
        %299 = sbr.rel (%p296) target = $region44
      $region43: #{tpu_custom_call.1} parent=39 // pred_region
        %vm300 = vcmask 31744
        %301 = vst.msk [vmem:[#allocation2] sm:$0xff] %vm300, 0.0
        %302 = vst.msk [vmem:[#allocation2 + $0x8] sm:$0xff] %vm300, 0.0
        %vm303 = vcmask 25600
        %304 = vst.msk [vmem:[#allocation2 + $0x10] sm:$0x3] %vm303, 0.0
        %305 = vst.msk [vmem:[#allocation2 + $0x18] sm:$0xff] %vm300, 0.0
        %306 = vst.msk [vmem:[#allocation2 + $0x20] sm:$0xff] %vm300, 0.0
        %307 = vst.msk [vmem:[#allocation2 + $0x28] sm:$0x3] %vm303, 0.0
        %308 = vst.msk [vmem:[#allocation2 + $0x30] sm:$0xff] %vm300, 0.0
        %309 = vst.msk [vmem:[#allocation2 + $0x38] sm:$0xff] %vm300, 0.0
        %310 = vst.msk [vmem:[#allocation2 + $0x40] sm:$0x3] %vm303, 0.0
        %311 = vst.msk [vmem:[#allocation2 + $0x48] sm:$0xff] %vm300, 0.0
        %312 = vst.msk [vmem:[#allocation2 + $0x50] sm:$0xff] %vm300, 0.0
        %313 = vst.msk [vmem:[#allocation2 + $0x58] sm:$0x3] %vm303, 0.0
        %314 = vst.msk [vmem:[#allocation2 + $0x60] sm:$0xff] %vm300, 0.0
        %315 = vst.msk [vmem:[#allocation2 + $0x68] sm:$0xff] %vm300, 0.0
        %316 = vst.msk [vmem:[#allocation2 + $0x70] sm:$0x3] %vm303, 0.0
        %317 = vst.msk [vmem:[#allocation2 + $0x78] sm:$0xff] %vm300, 0.0
        %318 = vst.msk [vmem:[#allocation2 + $0x80] sm:$0xff] %vm300, 0.0
        %319 = vst.msk [vmem:[#allocation2 + $0x88] sm:$0x3] %vm303, 0.0
        %320 = vst.msk [vmem:[#allocation2 + $0x90] sm:$0xff] %vm300, 0.0
        %321 = vst.msk [vmem:[#allocation2 + $0x98] sm:$0xff] %vm300, 0.0
        %322 = vst.msk [vmem:[#allocation2 + $0xa0] sm:$0x3] %vm303, 0.0
        %323 = vst.msk [vmem:[#allocation2 + $0xa8] sm:$0xff] %vm300, 0.0
        %324 = vst.msk [vmem:[#allocation2 + $0xb0] sm:$0xff] %vm300, 0.0
        %325 = vst.msk [vmem:[#allocation2 + $0xb8] sm:$0x3] %vm303, 0.0
        %326 = vst.msk [vmem:[#allocation2 + $0xc0] sm:$0xff] %vm300, 0.0
        %327 = vst.msk [vmem:[#allocation2 + $0xc8] sm:$0xff] %vm300, 0.0
        %328 = vst.msk [vmem:[#allocation2 + $0xd0] sm:$0x3] %vm303, 0.0
        %329 = vst.msk [vmem:[#allocation2 + $0xd8] sm:$0xff] %vm300, 0.0
        %330 = vst.msk [vmem:[#allocation2 + $0xe0] sm:$0xff] %vm300, 0.0
        %331 = vst.msk [vmem:[#allocation2 + $0xe8] sm:$0x3] %vm303, 0.0
        %332 = vst.msk [vmem:[#allocation2 + $0xf0] sm:$0xff] %vm300, 0.0
        %333 = vst.msk [vmem:[#allocation2 + $0xf8] sm:$0xff] %vm300, 0.0
        %334 = vst.msk [vmem:[#allocation2 + $0x100] sm:$0x3] %vm303, 0.0
        %335 = vst.msk [vmem:[#allocation2 + $0x108] sm:$0xff] %vm300, 0.0
        %336 = vst.msk [vmem:[#allocation2 + $0x110] sm:$0xff] %vm300, 0.0
        %337 = vst.msk [vmem:[#allocation2 + $0x118] sm:$0x3] %vm303, 0.0
        %338 = vst.msk [vmem:[#allocation2 + $0x120] sm:$0xff] %vm300, 0.0
        %339 = vst.msk [vmem:[#allocation2 + $0x128] sm:$0xff] %vm300, 0.0
        %340 = vst.msk [vmem:[#allocation2 + $0x130] sm:$0x3] %vm303, 0.0
        %341 = vst.msk [vmem:[#allocation2 + $0x138] sm:$0xff] %vm300, 0.0
        %342 = vst.msk [vmem:[#allocation2 + $0x140] sm:$0xff] %vm300, 0.0
        %343 = vst.msk [vmem:[#allocation2 + $0x148] sm:$0x3] %vm303, 0.0
        %344 = vst.msk [vmem:[#allocation2 + $0x150] sm:$0xff] %vm300, 0.0
        %345 = vst.msk [vmem:[#allocation2 + $0x158] sm:$0xff] %vm300, 0.0
        %346 = vst.msk [vmem:[#allocation2 + $0x160] sm:$0x3] %vm303, 0.0
        %347 = vst.msk [vmem:[#allocation2 + $0x168] sm:$0xff] %vm300, 0.0
        %348 = vst.msk [vmem:[#allocation2 + $0x170] sm:$0xff] %vm300, 0.0
        %349 = vst.msk [vmem:[#allocation2 + $0x178] sm:$0x3] %vm303, 0.0
        %350 = vst.msk [vmem:[#allocation2 + $0x180] sm:$0xff] %vm300, 0.0
        %351 = vst.msk [vmem:[#allocation2 + $0x188] sm:$0xff] %vm300, 0.0
        %352 = vst.msk [vmem:[#allocation2 + $0x190] sm:$0x3] %vm303, 0.0
        %353 = vst.msk [vmem:[#allocation2 + $0x198] sm:$0xff] %vm300, 0.0
        %354 = vst.msk [vmem:[#allocation2 + $0x1a0] sm:$0xff] %vm300, 0.0
        %355 = vst.msk [vmem:[#allocation2 + $0x1a8] sm:$0x3] %vm303, 0.0
        %v356 = vld [vmem:[%s273] sm:$0xff]
        %v357 = vld [vmem:[%s273 + $0x8] sm:$0xff]
        %v358 = vld [vmem:[%s273 + $0x10] sm:$0xff]
        %v359 = vld [vmem:[%s273 + $0x18] sm:$0xff]
        %v360 = vld [vmem:[%s273 + $0x20] sm:$0xff]
        %v361 = vld [vmem:[%s273 + $0x28] sm:$0xff]
        %v362 = vld [vmem:[%s273 + $0x30] sm:$0xff]
        %v363 = vld [vmem:[%s273 + $0x38] sm:$0xff]
        %v364 = vld [vmem:[%s273 + $0x40] sm:$0xff]
        %v365 = vld [vmem:[%s273 + $0x48] sm:$0xff]
        %v366 = vld [vmem:[%s273 + $0x50] sm:$0xff]
        %v367 = vld [vmem:[%s273 + $0x58] sm:$0xff]
        %v368 = vld [vmem:[%s273 + $0x60] sm:$0xff]
        %v369 = vld [vmem:[%s273 + $0x68] sm:$0xff]
        %v370 = vld [vmem:[%s273 + $0x70] sm:$0xff]
        %v371 = vld [vmem:[%s273 + $0x78] sm:$0xff]
        %v372 = vld [vmem:[%s273 + $0x80] sm:$0xff]
        %v373 = vld [vmem:[%s273 + $0x88] sm:$0xff]
        %v374 = vld [vmem:[%s273 + $0x90] sm:$0xff]
        %v375 = vld [vmem:[%s273 + $0x98] sm:$0xff]
        %v376 = vld [vmem:[%s273 + $0xa0] sm:$0xff]
        %v377 = vld [vmem:[%s273 + $0xa8] sm:$0xff]
        %v378 = vld [vmem:[%s273 + $0xb0] sm:$0xff]
        %v379 = vld [vmem:[%s273 + $0xb8] sm:$0xff]
        %v380 = vld [vmem:[%s273 + $0xc0] sm:$0xff]
        %v381 = vld [vmem:[%s273 + $0xc8] sm:$0xff]
        %v382 = vld [vmem:[%s273 + $0xd0] sm:$0xff]
        %v383 = vld [vmem:[%s273 + $0xd8] sm:$0xff]
        %v384 = vld [vmem:[%s273 + $0xe0] sm:$0xff]
        %v385 = vld [vmem:[%s273 + $0xe8] sm:$0xff]
        %v386 = vld [vmem:[%s273 + $0xf0] sm:$0xff]
        %v387 = vld [vmem:[%s273 + $0xf8] sm:$0xff]
        %s388 = scalar_lea.vmem [#allocation2], 24
        %389 = vst.msk [vmem:[%s388 + $0x1] sm:$0xff] %vm300, %v356
        %390 = vst.msk [vmem:[%s388 + $0x9] sm:$0xff] %vm300, %v357
        %391 = vst.msk [vmem:[%s388 + $0x19] sm:$0xff] %vm300, %v358
        %392 = vst.msk [vmem:[%s388 + $0x21] sm:$0xff] %vm300, %v359
        %393 = vst.msk [vmem:[%s388 + $0x31] sm:$0xff] %vm300, %v360
        %394 = vst.msk [vmem:[%s388 + $0x39] sm:$0xff] %vm300, %v361
        %395 = vst.msk [vmem:[%s388 + $0x49] sm:$0xff] %vm300, %v362
        %396 = vst.msk [vmem:[%s388 + $0x51] sm:$0xff] %vm300, %v363
        %397 = vst.msk [vmem:[%s388 + $0x61] sm:$0xff] %vm300, %v364
        %398 = vst.msk [vmem:[%s388 + $0x69] sm:$0xff] %vm300, %v365
        %399 = vst.msk [vmem:[%s388 + $0x79] sm:$0xff] %vm300, %v366
        %400 = vst.msk [vmem:[%s388 + $0x81] sm:$0xff] %vm300, %v367
        %401 = vst.msk [vmem:[%s388 + $0x91] sm:$0xff] %vm300, %v368
        %402 = vst.msk [vmem:[%s388 + $0x99] sm:$0xff] %vm300, %v369
        %403 = vst.msk [vmem:[%s388 + $0xa9] sm:$0xff] %vm300, %v370
        %404 = vst.msk [vmem:[%s388 + $0xb1] sm:$0xff] %vm300, %v371
        %405 = vst.msk [vmem:[%s388 + $0xc1] sm:$0xff] %vm300, %v372
        %406 = vst.msk [vmem:[%s388 + $0xc9] sm:$0xff] %vm300, %v373
        %407 = vst.msk [vmem:[%s388 + $0xd9] sm:$0xff] %vm300, %v374
        %408 = vst.msk [vmem:[%s388 + $0xe1] sm:$0xff] %vm300, %v375
        %409 = vst.msk [vmem:[%s388 + $0xf1] sm:$0xff] %vm300, %v376
        %410 = vst.msk [vmem:[%s388 + $0xf9] sm:$0xff] %vm300, %v377
        %411 = vst.msk [vmem:[%s388 + $0x109] sm:$0xff] %vm300, %v378
        %412 = vst.msk [vmem:[%s388 + $0x111] sm:$0xff] %vm300, %v379
        %413 = vst.msk [vmem:[%s388 + $0x121] sm:$0xff] %vm300, %v380
        %414 = vst.msk [vmem:[%s388 + $0x129] sm:$0xff] %vm300, %v381
        %415 = vst.msk [vmem:[%s388 + $0x139] sm:$0xff] %vm300, %v382
        %416 = vst.msk [vmem:[%s388 + $0x141] sm:$0xff] %vm300, %v383
        %417 = vst.msk [vmem:[%s388 + $0x151] sm:$0xff] %vm300, %v384
        %418 = vst.msk [vmem:[%s388 + $0x159] sm:$0xff] %vm300, %v385
        %419 = vst.msk [vmem:[%s388 + $0x169] sm:$0xff] %vm300, %v386
        %420 = vst.msk [vmem:[%s388 + $0x171] sm:$0xff] %vm300, %v387
        %v421 = vld [vmem:[#allocation2] sm:$0xff]
        %v422 = vld [vmem:[#allocation2 + $0x8] sm:$0xff]
        %v423 = vld [vmem:[#allocation2 + $0x18] sm:$0xff]
        %v424 = vld [vmem:[#allocation2 + $0x20] sm:$0xff]
        %v425 = vld [vmem:[#allocation2 + $0x30] sm:$0xff]
        %v426 = vld [vmem:[#allocation2 + $0x38] sm:$0xff]
        %v427 = vld [vmem:[#allocation2 + $0x48] sm:$0xff]
        %v428 = vld [vmem:[#allocation2 + $0x50] sm:$0xff]
        %v429 = vld [vmem:[#allocation2 + $0x60] sm:$0xff]
        %v430 = vld [vmem:[#allocation2 + $0x68] sm:$0xff]
        %v431 = vld [vmem:[#allocation2 + $0x78] sm:$0xff]
        %v432 = vld [vmem:[#allocation2 + $0x80] sm:$0xff]
        %v433 = vld [vmem:[#allocation2 + $0x90] sm:$0xff]
        %v434 = vld [vmem:[#allocation2 + $0x98] sm:$0xff]
        %v435 = vld [vmem:[#allocation2 + $0xa8] sm:$0xff]
        %v436 = vld [vmem:[#allocation2 + $0xb0] sm:$0xff]
        %v437 = vld [vmem:[#allocation2 + $0xc0] sm:$0xff]
        %v438 = vld [vmem:[#allocation2 + $0xc8] sm:$0xff]
        %v439 = vld [vmem:[#allocation2 + $0xd8] sm:$0xff]
        %v440 = vld [vmem:[#allocation2 + $0xe0] sm:$0xff]
        %v441 = vld [vmem:[#allocation2 + $0xf0] sm:$0xff]
        %v442 = vld [vmem:[#allocation2 + $0xf8] sm:$0xff]
        %v443 = vld [vmem:[#allocation2 + $0x108] sm:$0xff]
        %v444 = vld [vmem:[#allocation2 + $0x110] sm:$0xff]
        %v445 = vld [vmem:[#allocation2 + $0x120] sm:$0xff]
        %v446 = vld [vmem:[#allocation2 + $0x128] sm:$0xff]
        %v447 = vld [vmem:[#allocation2 + $0x138] sm:$0xff]
        %v448 = vld [vmem:[#allocation2 + $0x140] sm:$0xff]
        %v449 = vld [vmem:[#allocation2 + $0x150] sm:$0xff]
        %v450 = vld [vmem:[#allocation2 + $0x158] sm:$0xff]
        %v451 = vld [vmem:[#allocation2 + $0x168] sm:$0xff]
        %v452 = vld [vmem:[#allocation2 + $0x170] sm:$0xff]
        %v453 = vld [vmem:[%s1] sm:$0x1]
        %v454 = vperm.slane %v453, 0
        %v455 = vmul.f32 %v421, %v454
        %v456 = vmul.f32 %v422, %v454
        %v457 = vmul.f32 %v423, %v454
        %v458 = vmul.f32 %v424, %v454
        %v459 = vmul.f32 %v425, %v454
        %v460 = vmul.f32 %v426, %v454
        %v461 = vmul.f32 %v427, %v454
        %v462 = vmul.f32 %v428, %v454
        %v463 = vmul.f32 %v429, %v454
        %v464 = vmul.f32 %v430, %v454
        %v465 = vmul.f32 %v431, %v454
        %v466 = vmul.f32 %v432, %v454
        %v467 = vmul.f32 %v433, %v454
        %v468 = vmul.f32 %v434, %v454
        %v469 = vmul.f32 %v435, %v454
        %v470 = vmul.f32 %v436, %v454
        %v471 = vmul.f32 %v437, %v454
        %v472 = vmul.f32 %v438, %v454
        %v473 = vmul.f32 %v439, %v454
        %v474 = vmul.f32 %v440, %v454
        %v475 = vmul.f32 %v441, %v454
        %v476 = vmul.f32 %v442, %v454
        %v477 = vmul.f32 %v443, %v454
        %v478 = vmul.f32 %v444, %v454
        %v479 = vmul.f32 %v445, %v454
        %v480 = vmul.f32 %v446, %v454
        %v481 = vmul.f32 %v447, %v454
        %v482 = vmul.f32 %v448, %v454
        %v483 = vmul.f32 %v449, %v454
        %v484 = vmul.f32 %v450, %v454
        %v485 = vmul.f32 %v451, %v454
        %v486 = vmul.f32 %v452, %v454
        %v487 = vadd.f32 %v455, 0.0
        %v488 = vadd.f32 %v456, 0.0
        %v489 = vadd.f32 %v457, 0.0
        %v490 = vadd.f32 %v458, 0.0
        %v491 = vadd.f32 %v459, 0.0
        %v492 = vadd.f32 %v460, 0.0
        %v493 = vadd.f32 %v461, 0.0
        %v494 = vadd.f32 %v462, 0.0
        %v495 = vadd.f32 %v463, 0.0
        %v496 = vadd.f32 %v464, 0.0
        %v497 = vadd.f32 %v465, 0.0
        %v498 = vadd.f32 %v466, 0.0
        %v499 = vadd.f32 %v467, 0.0
        %v500 = vadd.f32 %v468, 0.0
        %v501 = vadd.f32 %v469, 0.0
        %v502 = vadd.f32 %v470, 0.0
        %v503 = vadd.f32 %v471, 0.0
        %v504 = vadd.f32 %v472, 0.0
        %v505 = vadd.f32 %v473, 0.0
        %v506 = vadd.f32 %v474, 0.0
        %v507 = vadd.f32 %v475, 0.0
        %v508 = vadd.f32 %v476, 0.0
        %v509 = vadd.f32 %v477, 0.0
        %v510 = vadd.f32 %v478, 0.0
        %v511 = vadd.f32 %v479, 0.0
        %v512 = vadd.f32 %v480, 0.0
        %v513 = vadd.f32 %v481, 0.0
        %v514 = vadd.f32 %v482, 0.0
        %v515 = vadd.f32 %v483, 0.0
        %v516 = vadd.f32 %v484, 0.0
        %v517 = vadd.f32 %v485, 0.0
        %v518 = vadd.f32 %v486, 0.0
        %v519 = vld [vmem:[#allocation2 + $0x1] sm:$0xff]
        %v520 = vld [vmem:[#allocation2 + $0x9] sm:$0xff]
        %v521 = vld [vmem:[#allocation2 + $0x19] sm:$0xff]
        %v522 = vld [vmem:[#allocation2 + $0x21] sm:$0xff]
        %v523 = vld [vmem:[#allocation2 + $0x31] sm:$0xff]
        %v524 = vld [vmem:[#allocation2 + $0x39] sm:$0xff]
        %v525 = vld [vmem:[#allocation2 + $0x49] sm:$0xff]
        %v526 = vld [vmem:[#allocation2 + $0x51] sm:$0xff]
        %v527 = vld [vmem:[#allocation2 + $0x61] sm:$0xff]
        %v528 = vld [vmem:[#allocation2 + $0x69] sm:$0xff]
        %v529 = vld [vmem:[#allocation2 + $0x79] sm:$0xff]
        %v530 = vld [vmem:[#allocation2 + $0x81] sm:$0xff]
        %v531 = vld [vmem:[#allocation2 + $0x91] sm:$0xff]
        %v532 = vld [vmem:[#allocation2 + $0x99] sm:$0xff]
        %v533 = vld [vmem:[#allocation2 + $0xa9] sm:$0xff]
        %v534 = vld [vmem:[#allocation2 + $0xb1] sm:$0xff]
        %v535 = vld [vmem:[#allocation2 + $0xc1] sm:$0xff]
        %v536 = vld [vmem:[#allocation2 + $0xc9] sm:$0xff]
        %v537 = vld [vmem:[#allocation2 + $0xd9] sm:$0xff]
        %v538 = vld [vmem:[#allocation2 + $0xe1] sm:$0xff]
        %v539 = vld [vmem:[#allocation2 + $0xf1] sm:$0xff]
        %v540 = vld [vmem:[#allocation2 + $0xf9] sm:$0xff]
        %v541 = vld [vmem:[#allocation2 + $0x109] sm:$0xff]
        %v542 = vld [vmem:[#allocation2 + $0x111] sm:$0xff]
        %v543 = vld [vmem:[#allocation2 + $0x121] sm:$0xff]
        %v544 = vld [vmem:[#allocation2 + $0x129] sm:$0xff]
        %v545 = vld [vmem:[#allocation2 + $0x139] sm:$0xff]
        %v546 = vld [vmem:[#allocation2 + $0x141] sm:$0xff]
        %v547 = vld [vmem:[#allocation2 + $0x151] sm:$0xff]
        %v548 = vld [vmem:[#allocation2 + $0x159] sm:$0xff]
        %v549 = vld [vmem:[#allocation2 + $0x169] sm:$0xff]
        %v550 = vld [vmem:[#allocation2 + $0x171] sm:$0xff]
        %v551 = vld [vmem:[%s1 + $0x1] sm:$0x1]
        %v552 = vperm.slane %v551, 0
        %v553 = vmul.f32 %v519, %v552
        %v554 = vmul.f32 %v520, %v552
        %v555 = vmul.f32 %v521, %v552
        %v556 = vmul.f32 %v522, %v552
        %v557 = vmul.f32 %v523, %v552
        %v558 = vmul.f32 %v524, %v552
        %v559 = vmul.f32 %v525, %v552
        %v560 = vmul.f32 %v526, %v552
        %v561 = vmul.f32 %v527, %v552
        %v562 = vmul.f32 %v528, %v552
        %v563 = vmul.f32 %v529, %v552
        %v564 = vmul.f32 %v530, %v552
        %v565 = vmul.f32 %v531, %v552
        %v566 = vmul.f32 %v532, %v552
        %v567 = vmul.f32 %v533, %v552
        %v568 = vmul.f32 %v534, %v552
        %v569 = vmul.f32 %v535, %v552
        %v570 = vmul.f32 %v536, %v552
        %v571 = vmul.f32 %v537, %v552
        %v572 = vmul.f32 %v538, %v552
        %v573 = vmul.f32 %v539, %v552
        %v574 = vmul.f32 %v540, %v552
        %v575 = vmul.f32 %v541, %v552
        %v576 = vmul.f32 %v542, %v552
        %v577 = vmul.f32 %v543, %v552
        %v578 = vmul.f32 %v544, %v552
        %v579 = vmul.f32 %v545, %v552
        %v580 = vmul.f32 %v546, %v552
        %v581 = vmul.f32 %v547, %v552
        %v582 = vmul.f32 %v548, %v552
        %v583 = vmul.f32 %v549, %v552
        %v584 = vmul.f32 %v550, %v552
        %v585 = vadd.f32 %v487, %v553
        %v586 = vadd.f32 %v488, %v554
        %v587 = vadd.f32 %v489, %v555
        %v588 = vadd.f32 %v490, %v556
        %v589 = vadd.f32 %v491, %v557
        %v590 = vadd.f32 %v492, %v558
        %v591 = vadd.f32 %v493, %v559
        %v592 = vadd.f32 %v494, %v560
        %v593 = vadd.f32 %v495, %v561
        %v594 = vadd.f32 %v496, %v562
        %v595 = vadd.f32 %v497, %v563
        %v596 = vadd.f32 %v498, %v564
        %v597 = vadd.f32 %v499, %v565
        %v598 = vadd.f32 %v500, %v566
        %v599 = vadd.f32 %v501, %v567
        %v600 = vadd.f32 %v502, %v568
        %v601 = vadd.f32 %v503, %v569
        %v602 = vadd.f32 %v504, %v570
        %v603 = vadd.f32 %v505, %v571
        %v604 = vadd.f32 %v506, %v572
        %v605 = vadd.f32 %v507, %v573
        %v606 = vadd.f32 %v508, %v574
        %v607 = vadd.f32 %v509, %v575
        %v608 = vadd.f32 %v510, %v576
        %v609 = vadd.f32 %v511, %v577
        %v610 = vadd.f32 %v512, %v578
        %v611 = vadd.f32 %v513, %v579
        %v612 = vadd.f32 %v514, %v580
        %v613 = vadd.f32 %v515, %v581
        %v614 = vadd.f32 %v516, %v582
        %v615 = vadd.f32 %v517, %v583
        %v616 = vadd.f32 %v518, %v584
        %v617 = vld [vmem:[#allocation2 + $0x2] sm:$0xff]
        %v618 = vld [vmem:[#allocation2 + $0xa] sm:$0xff]
        %v619 = vld [vmem:[#allocation2 + $0x1a] sm:$0xff]
        %v620 = vld [vmem:[#allocation2 + $0x22] sm:$0xff]
        %v621 = vld [vmem:[#allocation2 + $0x32] sm:$0xff]
        %v622 = vld [vmem:[#allocation2 + $0x3a] sm:$0xff]
        %v623 = vld [vmem:[#allocation2 + $0x4a] sm:$0xff]
        %v624 = vld [vmem:[#allocation2 + $0x52] sm:$0xff]
        %v625 = vld [vmem:[#allocation2 + $0x62] sm:$0xff]
        %v626 = vld [vmem:[#allocation2 + $0x6a] sm:$0xff]
        %v627 = vld [vmem:[#allocation2 + $0x7a] sm:$0xff]
        %v628 = vld [vmem:[#allocation2 + $0x82] sm:$0xff]
        %v629 = vld [vmem:[#allocation2 + $0x92] sm:$0xff]
        %v630 = vld [vmem:[#allocation2 + $0x9a] sm:$0xff]
        %v631 = vld [vmem:[#allocation2 + $0xaa] sm:$0xff]
        %v632 = vld [vmem:[#allocation2 + $0xb2] sm:$0xff]
        %v633 = vld [vmem:[#allocation2 + $0xc2] sm:$0xff]
        %v634 = vld [vmem:[#allocation2 + $0xca] sm:$0xff]
        %v635 = vld [vmem:[#allocation2 + $0xda] sm:$0xff]
        %v636 = vld [vmem:[#allocation2 + $0xe2] sm:$0xff]
        %v637 = vld [vmem:[#allocation2 + $0xf2] sm:$0xff]
        %v638 = vld [vmem:[#allocation2 + $0xfa] sm:$0xff]
        %v639 = vld [vmem:[#allocation2 + $0x10a] sm:$0xff]
        %v640 = vld [vmem:[#allocation2 + $0x112] sm:$0xff]
        %v641 = vld [vmem:[#allocation2 + $0x122] sm:$0xff]
        %v642 = vld [vmem:[#allocation2 + $0x12a] sm:$0xff]
        %v643 = vld [vmem:[#allocation2 + $0x13a] sm:$0xff]
        %v644 = vld [vmem:[#allocation2 + $0x142] sm:$0xff]
        %v645 = vld [vmem:[#allocation2 + $0x152] sm:$0xff]
        %v646 = vld [vmem:[#allocation2 + $0x15a] sm:$0xff]
        %v647 = vld [vmem:[#allocation2 + $0x16a] sm:$0xff]
        %v648 = vld [vmem:[#allocation2 + $0x172] sm:$0xff]
        %v649 = vld [vmem:[%s1 + $0x2] sm:$0x1]
        %v650 = vperm.slane %v649, 0
        %v651 = vmul.f32 %v617, %v650
        %v652 = vmul.f32 %v618, %v650
        %v653 = vmul.f32 %v619, %v650
        %v654 = vmul.f32 %v620, %v650
        %v655 = vmul.f32 %v621, %v650
        %v656 = vmul.f32 %v622, %v650
        %v657 = vmul.f32 %v623, %v650
        %v658 = vmul.f32 %v624, %v650
        %v659 = vmul.f32 %v625, %v650
        %v660 = vmul.f32 %v626, %v650
        %v661 = vmul.f32 %v627, %v650
        %v662 = vmul.f32 %v628, %v650
        %v663 = vmul.f32 %v629, %v650
        %v664 = vmul.f32 %v630, %v650
        %v665 = vmul.f32 %v631, %v650
        %v666 = vmul.f32 %v632, %v650
        %v667 = vmul.f32 %v633, %v650
        %v668 = vmul.f32 %v634, %v650
        %v669 = vmul.f32 %v635, %v650
        %v670 = vmul.f32 %v636, %v650
        %v671 = vmul.f32 %v637, %v650
        %v672 = vmul.f32 %v638, %v650
        %v673 = vmul.f32 %v639, %v650
        %v674 = vmul.f32 %v640, %v650
        %v675 = vmul.f32 %v641, %v650
        %v676 = vmul.f32 %v642, %v650
        %v677 = vmul.f32 %v643, %v650
        %v678 = vmul.f32 %v644, %v650
        %v679 = vmul.f32 %v645, %v650
        %v680 = vmul.f32 %v646, %v650
        %v681 = vmul.f32 %v647, %v650
        %v682 = vmul.f32 %v648, %v650
        %v683 = vadd.f32 %v585, %v651
        %v684 = vadd.f32 %v586, %v652
        %v685 = vadd.f32 %v587, %v653
        %v686 = vadd.f32 %v588, %v654
        %v687 = vadd.f32 %v589, %v655
        %v688 = vadd.f32 %v590, %v656
        %v689 = vadd.f32 %v591, %v657
        %v690 = vadd.f32 %v592, %v658
        %v691 = vadd.f32 %v593, %v659
        %v692 = vadd.f32 %v594, %v660
        %v693 = vadd.f32 %v595, %v661
        %v694 = vadd.f32 %v596, %v662
        %v695 = vadd.f32 %v597, %v663
        %v696 = vadd.f32 %v598, %v664
        %v697 = vadd.f32 %v599, %v665
        %v698 = vadd.f32 %v600, %v666
        %v699 = vadd.f32 %v601, %v667
        %v700 = vadd.f32 %v602, %v668
        %v701 = vadd.f32 %v603, %v669
        %v702 = vadd.f32 %v604, %v670
        %v703 = vadd.f32 %v605, %v671
        %v704 = vadd.f32 %v606, %v672
        %v705 = vadd.f32 %v607, %v673
        %v706 = vadd.f32 %v608, %v674
        %v707 = vadd.f32 %v609, %v675
        %v708 = vadd.f32 %v610, %v676
        %v709 = vadd.f32 %v611, %v677
        %v710 = vadd.f32 %v612, %v678
        %v711 = vadd.f32 %v613, %v679
        %v712 = vadd.f32 %v614, %v680
        %v713 = vadd.f32 %v615, %v681
        %v714 = vadd.f32 %v616, %v682
        %v715 = vld [vmem:[%s388] sm:$0xff]
        %v716 = vld [vmem:[%s388 + $0x8] sm:$0xff]
        %v717 = vld [vmem:[%s388 + $0x18] sm:$0xff]
        %v718 = vld [vmem:[%s388 + $0x20] sm:$0xff]
        %v719 = vld [vmem:[%s388 + $0x30] sm:$0xff]
        %v720 = vld [vmem:[%s388 + $0x38] sm:$0xff]
        %v721 = vld [vmem:[%s388 + $0x48] sm:$0xff]
        %v722 = vld [vmem:[%s388 + $0x50] sm:$0xff]
        %v723 = vld [vmem:[%s388 + $0x60] sm:$0xff]
        %v724 = vld [vmem:[%s388 + $0x68] sm:$0xff]
        %v725 = vld [vmem:[%s388 + $0x78] sm:$0xff]
        %v726 = vld [vmem:[%s388 + $0x80] sm:$0xff]
        %v727 = vld [vmem:[%s388 + $0x90] sm:$0xff]
        %v728 = vld [vmem:[%s388 + $0x98] sm:$0xff]
        %v729 = vld [vmem:[%s388 + $0xa8] sm:$0xff]
        %v730 = vld [vmem:[%s388 + $0xb0] sm:$0xff]
        %v731 = vld [vmem:[%s388 + $0xc0] sm:$0xff]
        %v732 = vld [vmem:[%s388 + $0xc8] sm:$0xff]
        %v733 = vld [vmem:[%s388 + $0xd8] sm:$0xff]
        %v734 = vld [vmem:[%s388 + $0xe0] sm:$0xff]
        %v735 = vld [vmem:[%s388 + $0xf0] sm:$0xff]
        %v736 = vld [vmem:[%s388 + $0xf8] sm:$0xff]
        %v737 = vld [vmem:[%s388 + $0x108] sm:$0xff]
        %v738 = vld [vmem:[%s388 + $0x110] sm:$0xff]
        %v739 = vld [vmem:[%s388 + $0x120] sm:$0xff]
        %v740 = vld [vmem:[%s388 + $0x128] sm:$0xff]
        %v741 = vld [vmem:[%s388 + $0x138] sm:$0xff]
        %v742 = vld [vmem:[%s388 + $0x140] sm:$0xff]
        %v743 = vld [vmem:[%s388 + $0x150] sm:$0xff]
        %v744 = vld [vmem:[%s388 + $0x158] sm:$0xff]
        %v745 = vld [vmem:[%s388 + $0x168] sm:$0xff]
        %v746 = vld [vmem:[%s388 + $0x170] sm:$0xff]
        %s747 = scalar_lea.vmem %s1, 4
        %v748 = vld [vmem:[%s747] sm:$0x1]
        %v749 = vperm.slane %v748, 0
        %v750 = vmul.f32 %v715, %v749
        %v751 = vmul.f32 %v716, %v749
        %v752 = vmul.f32 %v717, %v749
        %v753 = vmul.f32 %v718, %v749
        %v754 = vmul.f32 %v719, %v749
        %v755 = vmul.f32 %v720, %v749
        %v756 = vmul.f32 %v721, %v749
        %v757 = vmul.f32 %v722, %v749
        %v758 = vmul.f32 %v723, %v749
        %v759 = vmul.f32 %v724, %v749
        %v760 = vmul.f32 %v725, %v749
        %v761 = vmul.f32 %v726, %v749
        %v762 = vmul.f32 %v727, %v749
        %v763 = vmul.f32 %v728, %v749
        %v764 = vmul.f32 %v729, %v749
        %v765 = vmul.f32 %v730, %v749
        %v766 = vmul.f32 %v731, %v749
        %v767 = vmul.f32 %v732, %v749
        %v768 = vmul.f32 %v733, %v749
        %v769 = vmul.f32 %v734, %v749
        %v770 = vmul.f32 %v735, %v749
        %v771 = vmul.f32 %v736, %v749
        %v772 = vmul.f32 %v737, %v749
        %v773 = vmul.f32 %v738, %v749
        %v774 = vmul.f32 %v739, %v749
        %v775 = vmul.f32 %v740, %v749
        %v776 = vmul.f32 %v741, %v749
        %v777 = vmul.f32 %v742, %v749
        %v778 = vmul.f32 %v743, %v749
        %v779 = vmul.f32 %v744, %v749
        %v780 = vmul.f32 %v745, %v749
        %v781 = vmul.f32 %v746, %v749
        %v782 = vadd.f32 %v683, %v750
        %v783 = vadd.f32 %v684, %v751
        %v784 = vadd.f32 %v685, %v752
        %v785 = vadd.f32 %v686, %v753
        %v786 = vadd.f32 %v687, %v754
        %v787 = vadd.f32 %v688, %v755
        %v788 = vadd.f32 %v689, %v756
        %v789 = vadd.f32 %v690, %v757
        %v790 = vadd.f32 %v691, %v758
        %v791 = vadd.f32 %v692, %v759
        %v792 = vadd.f32 %v693, %v760
        %v793 = vadd.f32 %v694, %v761
        %v794 = vadd.f32 %v695, %v762
        %v795 = vadd.f32 %v696, %v763
        %v796 = vadd.f32 %v697, %v764
        %v797 = vadd.f32 %v698, %v765
        %v798 = vadd.f32 %v699, %v766
        %v799 = vadd.f32 %v700, %v767
        %v800 = vadd.f32 %v701, %v768
        %v801 = vadd.f32 %v702, %v769
        %v802 = vadd.f32 %v703, %v770
        %v803 = vadd.f32 %v704, %v771
        %v804 = vadd.f32 %v705, %v772
        %v805 = vadd.f32 %v706, %v773
        %v806 = vadd.f32 %v707, %v774
        %v807 = vadd.f32 %v708, %v775
        %v808 = vadd.f32 %v709, %v776
        %v809 = vadd.f32 %v710, %v777
        %v810 = vadd.f32 %v711, %v778
        %v811 = vadd.f32 %v712, %v779
        %v812 = vadd.f32 %v713, %v780
        %v813 = vadd.f32 %v714, %v781
        %v814 = vld [vmem:[%s388 + $0x1] sm:$0xff]
        %v815 = vld [vmem:[%s388 + $0x9] sm:$0xff]
        %v816 = vld [vmem:[%s388 + $0x19] sm:$0xff]
        %v817 = vld [vmem:[%s388 + $0x21] sm:$0xff]
        %v818 = vld [vmem:[%s388 + $0x31] sm:$0xff]
        %v819 = vld [vmem:[%s388 + $0x39] sm:$0xff]
        %v820 = vld [vmem:[%s388 + $0x49] sm:$0xff]
        %v821 = vld [vmem:[%s388 + $0x51] sm:$0xff]
        %v822 = vld [vmem:[%s388 + $0x61] sm:$0xff]
        %v823 = vld [vmem:[%s388 + $0x69] sm:$0xff]
        %v824 = vld [vmem:[%s388 + $0x79] sm:$0xff]
        %v825 = vld [vmem:[%s388 + $0x81] sm:$0xff]
        %v826 = vld [vmem:[%s388 + $0x91] sm:$0xff]
        %v827 = vld [vmem:[%s388 + $0x99] sm:$0xff]
        %v828 = vld [vmem:[%s388 + $0xa9] sm:$0xff]
        %v829 = vld [vmem:[%s388 + $0xb1] sm:$0xff]
        %v830 = vld [vmem:[%s388 + $0xc1] sm:$0xff]
        %v831 = vld [vmem:[%s388 + $0xc9] sm:$0xff]
        %v832 = vld [vmem:[%s388 + $0xd9] sm:$0xff]
        %v833 = vld [vmem:[%s388 + $0xe1] sm:$0xff]
        %v834 = vld [vmem:[%s388 + $0xf1] sm:$0xff]
        %v835 = vld [vmem:[%s388 + $0xf9] sm:$0xff]
        %v836 = vld [vmem:[%s388 + $0x109] sm:$0xff]
        %v837 = vld [vmem:[%s388 + $0x111] sm:$0xff]
        %v838 = vld [vmem:[%s388 + $0x121] sm:$0xff]
        %v839 = vld [vmem:[%s388 + $0x129] sm:$0xff]
        %v840 = vld [vmem:[%s388 + $0x139] sm:$0xff]
        %v841 = vld [vmem:[%s388 + $0x141] sm:$0xff]
        %v842 = vld [vmem:[%s388 + $0x151] sm:$0xff]
        %v843 = vld [vmem:[%s388 + $0x159] sm:$0xff]
        %v844 = vld [vmem:[%s388 + $0x169] sm:$0xff]
        %v845 = vld [vmem:[%s388 + $0x171] sm:$0xff]
        %v846 = vld [vmem:[%s747 + $0x1] sm:$0x1]
        %v847 = vperm.slane %v846, 0
        %v848 = vmul.f32 %v814, %v847
        %v849 = vmul.f32 %v815, %v847
        %v850 = vmul.f32 %v816, %v847
        %v851 = vmul.f32 %v817, %v847
        %v852 = vmul.f32 %v818, %v847
        %v853 = vmul.f32 %v819, %v847
        %v854 = vmul.f32 %v820, %v847
        %v855 = vmul.f32 %v821, %v847
        %v856 = vmul.f32 %v822, %v847
        %v857 = vmul.f32 %v823, %v847
        %v858 = vmul.f32 %v824, %v847
        %v859 = vmul.f32 %v825, %v847
        %v860 = vmul.f32 %v826, %v847
        %v861 = vmul.f32 %v827, %v847
        %v862 = vmul.f32 %v828, %v847
        %v863 = vmul.f32 %v829, %v847
        %v864 = vmul.f32 %v830, %v847
        %v865 = vmul.f32 %v831, %v847
        %v866 = vmul.f32 %v832, %v847
        %v867 = vmul.f32 %v833, %v847
        %v868 = vmul.f32 %v834, %v847
        %v869 = vmul.f32 %v835, %v847
        %v870 = vmul.f32 %v836, %v847
        %v871 = vmul.f32 %v837, %v847
        %v872 = vmul.f32 %v838, %v847
        %v873 = vmul.f32 %v839, %v847
        %v874 = vmul.f32 %v840, %v847
        %v875 = vmul.f32 %v841, %v847
        %v876 = vmul.f32 %v842, %v847
        %v877 = vmul.f32 %v843, %v847
        %v878 = vmul.f32 %v844, %v847
        %v879 = vmul.f32 %v845, %v847
        %v880 = vadd.f32 %v782, %v848
        %v881 = vadd.f32 %v783, %v849
        %v882 = vadd.f32 %v784, %v850
        %v883 = vadd.f32 %v785, %v851
        %v884 = vadd.f32 %v786, %v852
        %v885 = vadd.f32 %v787, %v853
        %v886 = vadd.f32 %v788, %v854
        %v887 = vadd.f32 %v789, %v855
        %v888 = vadd.f32 %v790, %v856
        %v889 = vadd.f32 %v791, %v857
        %v890 = vadd.f32 %v792, %v858
        %v891 = vadd.f32 %v793, %v859
        %v892 = vadd.f32 %v794, %v860
        %v893 = vadd.f32 %v795, %v861
        %v894 = vadd.f32 %v796, %v862
        %v895 = vadd.f32 %v797, %v863
        %v896 = vadd.f32 %v798, %v864
        %v897 = vadd.f32 %v799, %v865
        %v898 = vadd.f32 %v800, %v866
        %v899 = vadd.f32 %v801, %v867
        %v900 = vadd.f32 %v802, %v868
        %v901 = vadd.f32 %v803, %v869
        %v902 = vadd.f32 %v804, %v870
        %v903 = vadd.f32 %v805, %v871
        %v904 = vadd.f32 %v806, %v872
        %v905 = vadd.f32 %v807, %v873
        %v906 = vadd.f32 %v808, %v874
        %v907 = vadd.f32 %v809, %v875
        %v908 = vadd.f32 %v810, %v876
        %v909 = vadd.f32 %v811, %v877
        %v910 = vadd.f32 %v812, %v878
        %v911 = vadd.f32 %v813, %v879
        %v912 = vld [vmem:[%s388 + $0x2] sm:$0xff]
        %v913 = vld [vmem:[%s388 + $0xa] sm:$0xff]
        %v914 = vld [vmem:[%s388 + $0x1a] sm:$0xff]
        %v915 = vld [vmem:[%s388 + $0x22] sm:$0xff]
        %v916 = vld [vmem:[%s388 + $0x32] sm:$0xff]
        %v917 = vld [vmem:[%s388 + $0x3a] sm:$0xff]
        %v918 = vld [vmem:[%s388 + $0x4a] sm:$0xff]
        %v919 = vld [vmem:[%s388 + $0x52] sm:$0xff]
        %v920 = vld [vmem:[%s388 + $0x62] sm:$0xff]
        %v921 = vld [vmem:[%s388 + $0x6a] sm:$0xff]
        %v922 = vld [vmem:[%s388 + $0x7a] sm:$0xff]
        %v923 = vld [vmem:[%s388 + $0x82] sm:$0xff]
        %v924 = vld [vmem:[%s388 + $0x92] sm:$0xff]
        %v925 = vld [vmem:[%s388 + $0x9a] sm:$0xff]
        %v926 = vld [vmem:[%s388 + $0xaa] sm:$0xff]
        %v927 = vld [vmem:[%s388 + $0xb2] sm:$0xff]
        %v928 = vld [vmem:[%s388 + $0xc2] sm:$0xff]
        %v929 = vld [vmem:[%s388 + $0xca] sm:$0xff]
        %v930 = vld [vmem:[%s388 + $0xda] sm:$0xff]
        %v931 = vld [vmem:[%s388 + $0xe2] sm:$0xff]
        %v932 = vld [vmem:[%s388 + $0xf2] sm:$0xff]
        %v933 = vld [vmem:[%s388 + $0xfa] sm:$0xff]
        %v934 = vld [vmem:[%s388 + $0x10a] sm:$0xff]
        %v935 = vld [vmem:[%s388 + $0x112] sm:$0xff]
        %v936 = vld [vmem:[%s388 + $0x122] sm:$0xff]
        %v937 = vld [vmem:[%s388 + $0x12a] sm:$0xff]
        %v938 = vld [vmem:[%s388 + $0x13a] sm:$0xff]
        %v939 = vld [vmem:[%s388 + $0x142] sm:$0xff]
        %v940 = vld [vmem:[%s388 + $0x152] sm:$0xff]
        %v941 = vld [vmem:[%s388 + $0x15a] sm:$0xff]
        %v942 = vld [vmem:[%s388 + $0x16a] sm:$0xff]
        %v943 = vld [vmem:[%s388 + $0x172] sm:$0xff]
        %v944 = vld [vmem:[%s747 + $0x2] sm:$0x1]
        %v945 = vperm.slane %v944, 0
        %v946 = vmul.f32 %v912, %v945
        %v947 = vmul.f32 %v913, %v945
        %v948 = vmul.f32 %v914, %v945
        %v949 = vmul.f32 %v915, %v945
        %v950 = vmul.f32 %v916, %v945
        %v951 = vmul.f32 %v917, %v945
        %v952 = vmul.f32 %v918, %v945
        %v953 = vmul.f32 %v919, %v945
        %v954 = vmul.f32 %v920, %v945
        %v955 = vmul.f32 %v921, %v945
        %v956 = vmul.f32 %v922, %v945
        %v957 = vmul.f32 %v923, %v945
        %v958 = vmul.f32 %v924, %v945
        %v959 = vmul.f32 %v925, %v945
        %v960 = vmul.f32 %v926, %v945
        %v961 = vmul.f32 %v927, %v945
        %v962 = vmul.f32 %v928, %v945
        %v963 = vmul.f32 %v929, %v945
        %v964 = vmul.f32 %v930, %v945
        %v965 = vmul.f32 %v931, %v945
        %v966 = vmul.f32 %v932, %v945
        %v967 = vmul.f32 %v933, %v945
        %v968 = vmul.f32 %v934, %v945
        %v969 = vmul.f32 %v935, %v945
        %v970 = vmul.f32 %v936, %v945
        %v971 = vmul.f32 %v937, %v945
        %v972 = vmul.f32 %v938, %v945
        %v973 = vmul.f32 %v939, %v945
        %v974 = vmul.f32 %v940, %v945
        %v975 = vmul.f32 %v941, %v945
        %v976 = vmul.f32 %v942, %v945
        %v977 = vmul.f32 %v943, %v945
        %v978 = vadd.f32 %v880, %v946
        %v979 = vadd.f32 %v881, %v947
        %v980 = vadd.f32 %v882, %v948
        %v981 = vadd.f32 %v883, %v949
        %v982 = vadd.f32 %v884, %v950
        %v983 = vadd.f32 %v885, %v951
        %v984 = vadd.f32 %v886, %v952
        %v985 = vadd.f32 %v887, %v953
        %v986 = vadd.f32 %v888, %v954
        %v987 = vadd.f32 %v889, %v955
        %v988 = vadd.f32 %v890, %v956
        %v989 = vadd.f32 %v891, %v957
        %v990 = vadd.f32 %v892, %v958
        %v991 = vadd.f32 %v893, %v959
        %v992 = vadd.f32 %v894, %v960
        %v993 = vadd.f32 %v895, %v961
        %v994 = vadd.f32 %v896, %v962
        %v995 = vadd.f32 %v897, %v963
        %v996 = vadd.f32 %v898, %v964
        %v997 = vadd.f32 %v899, %v965
        %v998 = vadd.f32 %v900, %v966
        %v999 = vadd.f32 %v901, %v967
        %v1000 = vadd.f32 %v902, %v968
        %v1001 = vadd.f32 %v903, %v969
        %v1002 = vadd.f32 %v904, %v970
        %v1003 = vadd.f32 %v905, %v971
        %v1004 = vadd.f32 %v906, %v972
        %v1005 = vadd.f32 %v907, %v973
        %v1006 = vadd.f32 %v908, %v974
        %v1007 = vadd.f32 %v909, %v975
        %v1008 = vadd.f32 %v910, %v976
        %v1009 = vadd.f32 %v911, %v977
        %s1010 = scalar_lea.vmem [#allocation2], 48
        %v1011 = vld [vmem:[%s1010] sm:$0xff]
        %v1012 = vld [vmem:[%s1010 + $0x8] sm:$0xff]
        %v1013 = vld [vmem:[%s1010 + $0x18] sm:$0xff]
        %v1014 = vld [vmem:[%s1010 + $0x20] sm:$0xff]
        %v1015 = vld [vmem:[%s1010 + $0x30] sm:$0xff]
        %v1016 = vld [vmem:[%s1010 + $0x38] sm:$0xff]
        %v1017 = vld [vmem:[%s1010 + $0x48] sm:$0xff]
        %v1018 = vld [vmem:[%s1010 + $0x50] sm:$0xff]
        %v1019 = vld [vmem:[%s1010 + $0x60] sm:$0xff]
        %v1020 = vld [vmem:[%s1010 + $0x68] sm:$0xff]
        %v1021 = vld [vmem:[%s1010 + $0x78] sm:$0xff]
        %v1022 = vld [vmem:[%s1010 + $0x80] sm:$0xff]
        %v1023 = vld [vmem:[%s1010 + $0x90] sm:$0xff]
        %v1024 = vld [vmem:[%s1010 + $0x98] sm:$0xff]
        %v1025 = vld [vmem:[%s1010 + $0xa8] sm:$0xff]
        %v1026 = vld [vmem:[%s1010 + $0xb0] sm:$0xff]
        %v1027 = vld [vmem:[%s1010 + $0xc0] sm:$0xff]
        %v1028 = vld [vmem:[%s1010 + $0xc8] sm:$0xff]
        %v1029 = vld [vmem:[%s1010 + $0xd8] sm:$0xff]
        %v1030 = vld [vmem:[%s1010 + $0xe0] sm:$0xff]
        %v1031 = vld [vmem:[%s1010 + $0xf0] sm:$0xff]
        %v1032 = vld [vmem:[%s1010 + $0xf8] sm:$0xff]
        %v1033 = vld [vmem:[%s1010 + $0x108] sm:$0xff]
        %v1034 = vld [vmem:[%s1010 + $0x110] sm:$0xff]
        %v1035 = vld [vmem:[%s1010 + $0x120] sm:$0xff]
        %v1036 = vld [vmem:[%s1010 + $0x128] sm:$0xff]
        %v1037 = vld [vmem:[%s1010 + $0x138] sm:$0xff]
        %v1038 = vld [vmem:[%s1010 + $0x140] sm:$0xff]
        %v1039 = vld [vmem:[%s1010 + $0x150] sm:$0xff]
        %v1040 = vld [vmem:[%s1010 + $0x158] sm:$0xff]
        %v1041 = vld [vmem:[%s1010 + $0x168] sm:$0xff]
        %v1042 = vld [vmem:[%s1010 + $0x170] sm:$0xff]
        %s1043 = scalar_lea.vmem %s1, 8
        %v1044 = vld [vmem:[%s1043] sm:$0x1]
        %v1045 = vperm.slane %v1044, 0
        %v1046 = vmul.f32 %v1011, %v1045
        %v1047 = vmul.f32 %v1012, %v1045
        %v1048 = vmul.f32 %v1013, %v1045
        %v1049 = vmul.f32 %v1014, %v1045
        %v1050 = vmul.f32 %v1015, %v1045
        %v1051 = vmul.f32 %v1016, %v1045
        %v1052 = vmul.f32 %v1017, %v1045
        %v1053 = vmul.f32 %v1018, %v1045
        %v1054 = vmul.f32 %v1019, %v1045
        %v1055 = vmul.f32 %v1020, %v1045
        %v1056 = vmul.f32 %v1021, %v1045
        %v1057 = vmul.f32 %v1022, %v1045
        %v1058 = vmul.f32 %v1023, %v1045
        %v1059 = vmul.f32 %v1024, %v1045
        %v1060 = vmul.f32 %v1025, %v1045
        %v1061 = vmul.f32 %v1026, %v1045
        %v1062 = vmul.f32 %v1027, %v1045
        %v1063 = vmul.f32 %v1028, %v1045
        %v1064 = vmul.f32 %v1029, %v1045
        %v1065 = vmul.f32 %v1030, %v1045
        %v1066 = vmul.f32 %v1031, %v1045
        %v1067 = vmul.f32 %v1032, %v1045
        %v1068 = vmul.f32 %v1033, %v1045
        %v1069 = vmul.f32 %v1034, %v1045
        %v1070 = vmul.f32 %v1035, %v1045
        %v1071 = vmul.f32 %v1036, %v1045
        %v1072 = vmul.f32 %v1037, %v1045
        %v1073 = vmul.f32 %v1038, %v1045
        %v1074 = vmul.f32 %v1039, %v1045
        %v1075 = vmul.f32 %v1040, %v1045
        %v1076 = vmul.f32 %v1041, %v1045
        %v1077 = vmul.f32 %v1042, %v1045
        %v1078 = vadd.f32 %v978, %v1046
        %v1079 = vadd.f32 %v979, %v1047
        %v1080 = vadd.f32 %v980, %v1048
        %v1081 = vadd.f32 %v981, %v1049
        %v1082 = vadd.f32 %v982, %v1050
        %v1083 = vadd.f32 %v983, %v1051
        %v1084 = vadd.f32 %v984, %v1052
        %v1085 = vadd.f32 %v985, %v1053
        %v1086 = vadd.f32 %v986, %v1054
        %v1087 = vadd.f32 %v987, %v1055
        %v1088 = vadd.f32 %v988, %v1056
        %v1089 = vadd.f32 %v989, %v1057
        %v1090 = vadd.f32 %v990, %v1058
        %v1091 = vadd.f32 %v991, %v1059
        %v1092 = vadd.f32 %v992, %v1060
        %v1093 = vadd.f32 %v993, %v1061
        %v1094 = vadd.f32 %v994, %v1062
        %v1095 = vadd.f32 %v995, %v1063
        %v1096 = vadd.f32 %v996, %v1064
        %v1097 = vadd.f32 %v997, %v1065
        %v1098 = vadd.f32 %v998, %v1066
        %v1099 = vadd.f32 %v999, %v1067
        %v1100 = vadd.f32 %v1000, %v1068
        %v1101 = vadd.f32 %v1001, %v1069
        %v1102 = vadd.f32 %v1002, %v1070
        %v1103 = vadd.f32 %v1003, %v1071
        %v1104 = vadd.f32 %v1004, %v1072
        %v1105 = vadd.f32 %v1005, %v1073
        %v1106 = vadd.f32 %v1006, %v1074
        %v1107 = vadd.f32 %v1007, %v1075
        %v1108 = vadd.f32 %v1008, %v1076
        %v1109 = vadd.f32 %v1009, %v1077
        %v1110 = vld [vmem:[%s1010 + $0x1] sm:$0xff]
        %v1111 = vld [vmem:[%s1010 + $0x9] sm:$0xff]
        %v1112 = vld [vmem:[%s1010 + $0x19] sm:$0xff]
        %v1113 = vld [vmem:[%s1010 + $0x21] sm:$0xff]
        %v1114 = vld [vmem:[%s1010 + $0x31] sm:$0xff]
        %v1115 = vld [vmem:[%s1010 + $0x39] sm:$0xff]
        %v1116 = vld [vmem:[%s1010 + $0x49] sm:$0xff]
        %v1117 = vld [vmem:[%s1010 + $0x51] sm:$0xff]
        %v1118 = vld [vmem:[%s1010 + $0x61] sm:$0xff]
        %v1119 = vld [vmem:[%s1010 + $0x69] sm:$0xff]
        %v1120 = vld [vmem:[%s1010 + $0x79] sm:$0xff]
        %v1121 = vld [vmem:[%s1010 + $0x81] sm:$0xff]
        %v1122 = vld [vmem:[%s1010 + $0x91] sm:$0xff]
        %v1123 = vld [vmem:[%s1010 + $0x99] sm:$0xff]
        %v1124 = vld [vmem:[%s1010 + $0xa9] sm:$0xff]
        %v1125 = vld [vmem:[%s1010 + $0xb1] sm:$0xff]
        %v1126 = vld [vmem:[%s1010 + $0xc1] sm:$0xff]
        %v1127 = vld [vmem:[%s1010 + $0xc9] sm:$0xff]
        %v1128 = vld [vmem:[%s1010 + $0xd9] sm:$0xff]
        %v1129 = vld [vmem:[%s1010 + $0xe1] sm:$0xff]
        %v1130 = vld [vmem:[%s1010 + $0xf1] sm:$0xff]
        %v1131 = vld [vmem:[%s1010 + $0xf9] sm:$0xff]
        %v1132 = vld [vmem:[%s1010 + $0x109] sm:$0xff]
        %v1133 = vld [vmem:[%s1010 + $0x111] sm:$0xff]
        %v1134 = vld [vmem:[%s1010 + $0x121] sm:$0xff]
        %v1135 = vld [vmem:[%s1010 + $0x129] sm:$0xff]
        %v1136 = vld [vmem:[%s1010 + $0x139] sm:$0xff]
        %v1137 = vld [vmem:[%s1010 + $0x141] sm:$0xff]
        %v1138 = vld [vmem:[%s1010 + $0x151] sm:$0xff]
        %v1139 = vld [vmem:[%s1010 + $0x159] sm:$0xff]
        %v1140 = vld [vmem:[%s1010 + $0x169] sm:$0xff]
        %v1141 = vld [vmem:[%s1010 + $0x171] sm:$0xff]
        %v1142 = vld [vmem:[%s1043 + $0x1] sm:$0x1]
        %v1143 = vperm.slane %v1142, 0
        %v1144 = vmul.f32 %v1110, %v1143
        %v1145 = vmul.f32 %v1111, %v1143
        %v1146 = vmul.f32 %v1112, %v1143
        %v1147 = vmul.f32 %v1113, %v1143
        %v1148 = vmul.f32 %v1114, %v1143
        %v1149 = vmul.f32 %v1115, %v1143
        %v1150 = vmul.f32 %v1116, %v1143
        %v1151 = vmul.f32 %v1117, %v1143
        %v1152 = vmul.f32 %v1118, %v1143
        %v1153 = vmul.f32 %v1119, %v1143
        %v1154 = vmul.f32 %v1120, %v1143
        %v1155 = vmul.f32 %v1121, %v1143
        %v1156 = vmul.f32 %v1122, %v1143
        %v1157 = vmul.f32 %v1123, %v1143
        %v1158 = vmul.f32 %v1124, %v1143
        %v1159 = vmul.f32 %v1125, %v1143
        %v1160 = vmul.f32 %v1126, %v1143
        %v1161 = vmul.f32 %v1127, %v1143
        %v1162 = vmul.f32 %v1128, %v1143
        %v1163 = vmul.f32 %v1129, %v1143
        %v1164 = vmul.f32 %v1130, %v1143
        %v1165 = vmul.f32 %v1131, %v1143
        %v1166 = vmul.f32 %v1132, %v1143
        %v1167 = vmul.f32 %v1133, %v1143
        %v1168 = vmul.f32 %v1134, %v1143
        %v1169 = vmul.f32 %v1135, %v1143
        %v1170 = vmul.f32 %v1136, %v1143
        %v1171 = vmul.f32 %v1137, %v1143
        %v1172 = vmul.f32 %v1138, %v1143
        %v1173 = vmul.f32 %v1139, %v1143
        %v1174 = vmul.f32 %v1140, %v1143
        %v1175 = vmul.f32 %v1141, %v1143
        %v1176 = vadd.f32 %v1078, %v1144
        %v1177 = vadd.f32 %v1079, %v1145
        %v1178 = vadd.f32 %v1080, %v1146
        %v1179 = vadd.f32 %v1081, %v1147
        %v1180 = vadd.f32 %v1082, %v1148
        %v1181 = vadd.f32 %v1083, %v1149
        %v1182 = vadd.f32 %v1084, %v1150
        %v1183 = vadd.f32 %v1085, %v1151
        %v1184 = vadd.f32 %v1086, %v1152
        %v1185 = vadd.f32 %v1087, %v1153
        %v1186 = vadd.f32 %v1088, %v1154
        %v1187 = vadd.f32 %v1089, %v1155
        %v1188 = vadd.f32 %v1090, %v1156
        %v1189 = vadd.f32 %v1091, %v1157
        %v1190 = vadd.f32 %v1092, %v1158
        %v1191 = vadd.f32 %v1093, %v1159
        %v1192 = vadd.f32 %v1094, %v1160
        %v1193 = vadd.f32 %v1095, %v1161
        %v1194 = vadd.f32 %v1096, %v1162
        %v1195 = vadd.f32 %v1097, %v1163
        %v1196 = vadd.f32 %v1098, %v1164
        %v1197 = vadd.f32 %v1099, %v1165
        %v1198 = vadd.f32 %v1100, %v1166
        %v1199 = vadd.f32 %v1101, %v1167
        %v1200 = vadd.f32 %v1102, %v1168
        %v1201 = vadd.f32 %v1103, %v1169
        %v1202 = vadd.f32 %v1104, %v1170
        %v1203 = vadd.f32 %v1105, %v1171
        %v1204 = vadd.f32 %v1106, %v1172
        %v1205 = vadd.f32 %v1107, %v1173
        %v1206 = vadd.f32 %v1108, %v1174
        %v1207 = vadd.f32 %v1109, %v1175
        %v1208 = vld [vmem:[%s1010 + $0x2] sm:$0xff]
        %v1209 = vld [vmem:[%s1010 + $0xa] sm:$0xff]
        %v1210 = vld [vmem:[%s1010 + $0x1a] sm:$0xff]
        %v1211 = vld [vmem:[%s1010 + $0x22] sm:$0xff]
        %v1212 = vld [vmem:[%s1010 + $0x32] sm:$0xff]
        %v1213 = vld [vmem:[%s1010 + $0x3a] sm:$0xff]
        %v1214 = vld [vmem:[%s1010 + $0x4a] sm:$0xff]
        %v1215 = vld [vmem:[%s1010 + $0x52] sm:$0xff]
        %v1216 = vld [vmem:[%s1010 + $0x62] sm:$0xff]
        %v1217 = vld [vmem:[%s1010 + $0x6a] sm:$0xff]
        %v1218 = vld [vmem:[%s1010 + $0x7a] sm:$0xff]
        %v1219 = vld [vmem:[%s1010 + $0x82] sm:$0xff]
        %v1220 = vld [vmem:[%s1010 + $0x92] sm:$0xff]
        %v1221 = vld [vmem:[%s1010 + $0x9a] sm:$0xff]
        %v1222 = vld [vmem:[%s1010 + $0xaa] sm:$0xff]
        %v1223 = vld [vmem:[%s1010 + $0xb2] sm:$0xff]
        %v1224 = vld [vmem:[%s1010 + $0xc2] sm:$0xff]
        %v1225 = vld [vmem:[%s1010 + $0xca] sm:$0xff]
        %v1226 = vld [vmem:[%s1010 + $0xda] sm:$0xff]
        %v1227 = vld [vmem:[%s1010 + $0xe2] sm:$0xff]
        %v1228 = vld [vmem:[%s1010 + $0xf2] sm:$0xff]
        %v1229 = vld [vmem:[%s1010 + $0xfa] sm:$0xff]
        %v1230 = vld [vmem:[%s1010 + $0x10a] sm:$0xff]
        %v1231 = vld [vmem:[%s1010 + $0x112] sm:$0xff]
        %v1232 = vld [vmem:[%s1010 + $0x122] sm:$0xff]
        %v1233 = vld [vmem:[%s1010 + $0x12a] sm:$0xff]
        %v1234 = vld [vmem:[%s1010 + $0x13a] sm:$0xff]
        %v1235 = vld [vmem:[%s1010 + $0x142] sm:$0xff]
        %v1236 = vld [vmem:[%s1010 + $0x152] sm:$0xff]
        %v1237 = vld [vmem:[%s1010 + $0x15a] sm:$0xff]
        %v1238 = vld [vmem:[%s1010 + $0x16a] sm:$0xff]
        %v1239 = vld [vmem:[%s1010 + $0x172] sm:$0xff]
        %v1240 = vld [vmem:[%s1043 + $0x2] sm:$0x1]
        %v1241 = vperm.slane %v1240, 0
        %v1242 = vmul.f32 %v1208, %v1241
        %v1243 = vmul.f32 %v1209, %v1241
        %v1244 = vmul.f32 %v1210, %v1241
        %v1245 = vmul.f32 %v1211, %v1241
        %v1246 = vmul.f32 %v1212, %v1241
        %v1247 = vmul.f32 %v1213, %v1241
        %v1248 = vmul.f32 %v1214, %v1241
        %v1249 = vmul.f32 %v1215, %v1241
        %v1250 = vmul.f32 %v1216, %v1241
        %v1251 = vmul.f32 %v1217, %v1241
        %v1252 = vmul.f32 %v1218, %v1241
        %v1253 = vmul.f32 %v1219, %v1241
        %v1254 = vmul.f32 %v1220, %v1241
        %v1255 = vmul.f32 %v1221, %v1241
        %v1256 = vmul.f32 %v1222, %v1241
        %v1257 = vmul.f32 %v1223, %v1241
        %v1258 = vmul.f32 %v1224, %v1241
        %v1259 = vmul.f32 %v1225, %v1241
        %v1260 = vmul.f32 %v1226, %v1241
        %v1261 = vmul.f32 %v1227, %v1241
        %v1262 = vmul.f32 %v1228, %v1241
        %v1263 = vmul.f32 %v1229, %v1241
        %v1264 = vmul.f32 %v1230, %v1241
        %v1265 = vmul.f32 %v1231, %v1241
        %v1266 = vmul.f32 %v1232, %v1241
        %v1267 = vmul.f32 %v1233, %v1241
        %v1268 = vmul.f32 %v1234, %v1241
        %v1269 = vmul.f32 %v1235, %v1241
        %v1270 = vmul.f32 %v1236, %v1241
        %v1271 = vmul.f32 %v1237, %v1241
        %v1272 = vmul.f32 %v1238, %v1241
        %v1273 = vmul.f32 %v1239, %v1241
        %v1274 = vadd.f32 %v1176, %v1242
        %v1275 = vadd.f32 %v1177, %v1243
        %v1276 = vadd.f32 %v1178, %v1244
        %v1277 = vadd.f32 %v1179, %v1245
        %v1278 = vadd.f32 %v1180, %v1246
        %v1279 = vadd.f32 %v1181, %v1247
        %v1280 = vadd.f32 %v1182, %v1248
        %v1281 = vadd.f32 %v1183, %v1249
        %v1282 = vadd.f32 %v1184, %v1250
        %v1283 = vadd.f32 %v1185, %v1251
        %v1284 = vadd.f32 %v1186, %v1252
        %v1285 = vadd.f32 %v1187, %v1253
        %v1286 = vadd.f32 %v1188, %v1254
        %v1287 = vadd.f32 %v1189, %v1255
        %v1288 = vadd.f32 %v1190, %v1256
        %v1289 = vadd.f32 %v1191, %v1257
        %v1290 = vadd.f32 %v1192, %v1258
        %v1291 = vadd.f32 %v1193, %v1259
        %v1292 = vadd.f32 %v1194, %v1260
        %v1293 = vadd.f32 %v1195, %v1261
        %v1294 = vadd.f32 %v1196, %v1262
        %v1295 = vadd.f32 %v1197, %v1263
        %v1296 = vadd.f32 %v1198, %v1264
        %v1297 = vadd.f32 %v1199, %v1265
        %v1298 = vadd.f32 %v1200, %v1266
        %v1299 = vadd.f32 %v1201, %v1267
        %v1300 = vadd.f32 %v1202, %v1268
        %v1301 = vadd.f32 %v1203, %v1269
        %v1302 = vadd.f32 %v1204, %v1270
        %v1303 = vadd.f32 %v1205, %v1271
        %v1304 = vadd.f32 %v1206, %v1272
        %v1305 = vadd.f32 %v1207, %v1273
        %v1306 = vld [vmem:[%s2] sm:$0x1]
        %v1308 = vperm.slane %v1306, 0
        %v1310 = vadd.f32 %v1274, %v1308
        %v1311 = vadd.f32 %v1275, %v1308
        %v1312 = vadd.f32 %v1276, %v1308
        %v1313 = vadd.f32 %v1277, %v1308
        %v1314 = vadd.f32 %v1278, %v1308
        %v1315 = vadd.f32 %v1279, %v1308
        %v1316 = vadd.f32 %v1280, %v1308
        %v1317 = vadd.f32 %v1281, %v1308
        %v1318 = vadd.f32 %v1282, %v1308
        %v1319 = vadd.f32 %v1283, %v1308
        %v1320 = vadd.f32 %v1284, %v1308
        %v1321 = vadd.f32 %v1285, %v1308
        %v1322 = vadd.f32 %v1286, %v1308
        %v1323 = vadd.f32 %v1287, %v1308
        %v1324 = vadd.f32 %v1288, %v1308
        %v1325 = vadd.f32 %v1289, %v1308
        %v1326 = vadd.f32 %v1290, %v1308
        %v1327 = vadd.f32 %v1291, %v1308
        %v1328 = vadd.f32 %v1292, %v1308
        %v1329 = vadd.f32 %v1293, %v1308
        %v1330 = vadd.f32 %v1294, %v1308
        %v1331 = vadd.f32 %v1295, %v1308
        %v1332 = vadd.f32 %v1296, %v1308
        %v1333 = vadd.f32 %v1297, %v1308
        %v1334 = vadd.f32 %v1298, %v1308
        %v1335 = vadd.f32 %v1299, %v1308
        %v1336 = vadd.f32 %v1300, %v1308
        %v1337 = vadd.f32 %v1301, %v1308
        %v1338 = vadd.f32 %v1302, %v1308
        %v1339 = vadd.f32 %v1303, %v1308
        %v1340 = vadd.f32 %v1304, %v1308
        %v1341 = vadd.f32 %v1305, %v1308
        %v1342 = vmax.f32 %v1310, 0.0
        %v1343 = vmax.f32 %v1311, 0.0
        %v1344 = vmax.f32 %v1312, 0.0
        %v1345 = vmax.f32 %v1313, 0.0
        %v1346 = vmax.f32 %v1314, 0.0
        %v1347 = vmax.f32 %v1315, 0.0
        %v1348 = vmax.f32 %v1316, 0.0
        %v1349 = vmax.f32 %v1317, 0.0
        %v1350 = vmax.f32 %v1318, 0.0
        %v1351 = vmax.f32 %v1319, 0.0
        %v1352 = vmax.f32 %v1320, 0.0
        %v1353 = vmax.f32 %v1321, 0.0
        %v1354 = vmax.f32 %v1322, 0.0
        %v1355 = vmax.f32 %v1323, 0.0
        %v1356 = vmax.f32 %v1324, 0.0
        %v1357 = vmax.f32 %v1325, 0.0
        %v1358 = vmax.f32 %v1326, 0.0
        %v1359 = vmax.f32 %v1327, 0.0
        %v1360 = vmax.f32 %v1328, 0.0
        %v1361 = vmax.f32 %v1329, 0.0
        %v1362 = vmax.f32 %v1330, 0.0
        %v1363 = vmax.f32 %v1331, 0.0
        %v1364 = vmax.f32 %v1332, 0.0
        %v1365 = vmax.f32 %v1333, 0.0
        %v1366 = vmax.f32 %v1334, 0.0
        %v1367 = vmax.f32 %v1335, 0.0
        %v1368 = vmax.f32 %v1336, 0.0
        %v1369 = vmax.f32 %v1337, 0.0
        %v1370 = vmax.f32 %v1338, 0.0
        %v1371 = vmax.f32 %v1339, 0.0
        %v1372 = vmax.f32 %v1340, 0.0
        %v1373 = vmax.f32 %v1341, 0.0
        %1374 = vst.msk [vmem:[#allocation3] sm:$0xff] %vm300, %v1342
        %1375 = vst.msk [vmem:[#allocation3 + $0x8] sm:$0xff] %vm300, %v1343
        %1376 = vst.msk [vmem:[#allocation3 + $0x10] sm:$0xff] %vm300, %v1344
        %1377 = vst.msk [vmem:[#allocation3 + $0x18] sm:$0xff] %vm300, %v1345
        %1378 = vst.msk [vmem:[#allocation3 + $0x20] sm:$0xff] %vm300, %v1346
        %1379 = vst.msk [vmem:[#allocation3 + $0x28] sm:$0xff] %vm300, %v1347
        %1380 = vst.msk [vmem:[#allocation3 + $0x30] sm:$0xff] %vm300, %v1348
        %1381 = vst.msk [vmem:[#allocation3 + $0x38] sm:$0xff] %vm300, %v1349
        %1382 = vst.msk [vmem:[#allocation3 + $0x40] sm:$0xff] %vm300, %v1350
        %1383 = vst.msk [vmem:[#allocation3 + $0x48] sm:$0xff] %vm300, %v1351
        %1384 = vst.msk [vmem:[#allocation3 + $0x50] sm:$0xff] %vm300, %v1352
        %1385 = vst.msk [vmem:[#allocation3 + $0x58] sm:$0xff] %vm300, %v1353
        %1386 = vst.msk [vmem:[#allocation3 + $0x60] sm:$0xff] %vm300, %v1354
        %1387 = vst.msk [vmem:[#allocation3 + $0x68] sm:$0xff] %vm300, %v1355
        %1388 = vst.msk [vmem:[#allocation3 + $0x70] sm:$0xff] %vm300, %v1356
        %1389 = vst.msk [vmem:[#allocation3 + $0x78] sm:$0xff] %vm300, %v1357
        %1390 = vst.msk [vmem:[#allocation3 + $0x80] sm:$0xff] %vm300, %v1358
        %1391 = vst.msk [vmem:[#allocation3 + $0x88] sm:$0xff] %vm300, %v1359
        %1392 = vst.msk [vmem:[#allocation3 + $0x90] sm:$0xff] %vm300, %v1360
        %1393 = vst.msk [vmem:[#allocation3 + $0x98] sm:$0xff] %vm300, %v1361
        %1394 = vst.msk [vmem:[#allocation3 + $0xa0] sm:$0xff] %vm300, %v1362
        %1395 = vst.msk [vmem:[#allocation3 + $0xa8] sm:$0xff] %vm300, %v1363
        %1396 = vst.msk [vmem:[#allocation3 + $0xb0] sm:$0xff] %vm300, %v1364
        %1397 = vst.msk [vmem:[#allocation3 + $0xb8] sm:$0xff] %vm300, %v1365
        %1398 = vst.msk [vmem:[#allocation3 + $0xc0] sm:$0xff] %vm300, %v1366
        %1399 = vst.msk [vmem:[#allocation3 + $0xc8] sm:$0xff] %vm300, %v1367
        %1400 = vst.msk [vmem:[#allocation3 + $0xd0] sm:$0xff] %vm300, %v1368
        %1401 = vst.msk [vmem:[#allocation3 + $0xd8] sm:$0xff] %vm300, %v1369
        %1402 = vst.msk [vmem:[#allocation3 + $0xe0] sm:$0xff] %vm300, %v1370
        %1403 = vst.msk [vmem:[#allocation3 + $0xe8] sm:$0xff] %vm300, %v1371
        %1404 = vst.msk [vmem:[#allocation3 + $0xf0] sm:$0xff] %vm300, %v1372
        %1405 = vst.msk [vmem:[#allocation3 + $0xf8] sm:$0xff] %vm300, %v1373
      $region44: #{tpu_custom_call.1} parent=39 // pred_fallthru
        _
      %s1406 = smul.u32 %s22, 256
      %s1407 = scalar_lea.vmem [#allocation3], %s1406
      %v1408 = vld [vmem:[%s1407] sm:$0xff]
      %v1409 = vld [vmem:[%s1407 + $0x8] sm:$0xff]
      %v1410 = vld [vmem:[%s1407 + $0x10] sm:$0xff]
      %v1411 = vld [vmem:[%s1407 + $0x18] sm:$0xff]
      %v1412 = vld [vmem:[%s1407 + $0x20] sm:$0xff]
      %v1413 = vld [vmem:[%s1407 + $0x28] sm:$0xff]
      %v1414 = vld [vmem:[%s1407 + $0x30] sm:$0xff]
      %v1415 = vld [vmem:[%s1407 + $0x38] sm:$0xff]
      %v1416 = vld [vmem:[%s1407 + $0x40] sm:$0xff]
      %v1417 = vld [vmem:[%s1407 + $0x48] sm:$0xff]
      %v1418 = vld [vmem:[%s1407 + $0x50] sm:$0xff]
      %v1419 = vld [vmem:[%s1407 + $0x58] sm:$0xff]
      %v1420 = vld [vmem:[%s1407 + $0x60] sm:$0xff]
      %v1421 = vld [vmem:[%s1407 + $0x68] sm:$0xff]
      %v1422 = vld [vmem:[%s1407 + $0x70] sm:$0xff]
      %v1423 = vld [vmem:[%s1407 + $0x78] sm:$0xff]
      %v1424 = vld [vmem:[%s1407 + $0x80] sm:$0xff]
      %v1425 = vld [vmem:[%s1407 + $0x88] sm:$0xff]
      %v1426 = vld [vmem:[%s1407 + $0x90] sm:$0xff]
      %v1427 = vld [vmem:[%s1407 + $0x98] sm:$0xff]
      %v1428 = vld [vmem:[%s1407 + $0xa0] sm:$0xff]
      %v1429 = vld [vmem:[%s1407 + $0xa8] sm:$0xff]
      %v1430 = vld [vmem:[%s1407 + $0xb0] sm:$0xff]
      %v1431 = vld [vmem:[%s1407 + $0xb8] sm:$0xff]
      %v1432 = vld [vmem:[%s1407 + $0xc0] sm:$0xff]
      %v1433 = vld [vmem:[%s1407 + $0xc8] sm:$0xff]
      %v1434 = vld [vmem:[%s1407 + $0xd0] sm:$0xff]
      %v1435 = vld [vmem:[%s1407 + $0xd8] sm:$0xff]
      %v1436 = vld [vmem:[%s1407 + $0xe0] sm:$0xff]
      %v1437 = vld [vmem:[%s1407 + $0xe8] sm:$0xff]
      %v1438 = vld [vmem:[%s1407 + $0xf0] sm:$0xff]
      %v1439 = vld [vmem:[%s1407 + $0xf8] sm:$0xff]
      %v1440 = vld [vmem:[%s277] sm:$0xf]
      %v1441 = vld [vmem:[%s280] sm:$0x1]
      %v1443 = vperm.slane %v1441, 0
      %vm1445 = vcmask 31744
      %v1447 = vsel %vm1445, %v1408, 0
      %v1450 = vsel %vm1445, %v1409, 0
      %v1453 = vsel %vm1445, %v1410, 0
      %v1456 = vsel %vm1445, %v1411, 0
      %v1459 = vsel %vm1445, %v1412, 0
      %v1462 = vsel %vm1445, %v1413, 0
      %v1465 = vsel %vm1445, %v1414, 0
      %v1468 = vsel %vm1445, %v1415, 0
      %v1471 = vsel %vm1445, %v1416, 0
      %v1474 = vsel %vm1445, %v1417, 0
      %v1477 = vsel %vm1445, %v1418, 0
      %v1480 = vsel %vm1445, %v1419, 0
      %v1483 = vsel %vm1445, %v1420, 0
      %v1486 = vsel %vm1445, %v1421, 0
      %v1489 = vsel %vm1445, %v1422, 0
      %v1492 = vsel %vm1445, %v1423, 0
      %v1495 = vsel %vm1445, %v1424, 0
      %v1498 = vsel %vm1445, %v1425, 0
      %v1501 = vsel %vm1445, %v1426, 0
      %v1504 = vsel %vm1445, %v1427, 0
      %v1507 = vsel %vm1445, %v1428, 0
      %v1510 = vsel %vm1445, %v1429, 0
      %v1513 = vsel %vm1445, %v1430, 0
      %v1516 = vsel %vm1445, %v1431, 0
      %v1519 = vsel %vm1445, %v1432, 0
      %v1522 = vsel %vm1445, %v1433, 0
      %v1525 = vsel %vm1445, %v1434, 0
      %v1528 = vsel %vm1445, %v1435, 0
      %v1531 = vsel %vm1445, %v1436, 0
      %v1534 = vsel %vm1445, %v1437, 0
      %v1537 = vsel %vm1445, %v1438, 0
      %v1540 = vsel %vm1445, %v1439, 0
      %vm1542 = vcmask 1043456
      %v1544 = vsel %vm1542, %v1440, 0
      %1546 = vmatpush.msra.mxu0 0.0
      %1547 = vmatpush.msra.mxu0 0.0
      %1548 = vmatpush.msra.mxu0 0.0
      %1549 = vmatpush.msra.mxu0 0.0
      %1550 = vmatpush.msra.mxu0 0.0
      %1551 = vmatpush.msra.mxu0 0.0
      %1552 = vmatpush.msra.mxu0 0.0
      %1553 = vmatpush.msra.mxu0 0.0
      %1554 = vmatpush.msra.mxu0 0.0
      %1555 = vmatpush.msra.mxu0 0.0
      %1556 = vmatpush.msra.mxu0 0.0
      %1557 = vmatpush.msra.mxu0 0.0
      %1558 = vmatpush.msra.mxu0 0.0
      %1559 = vmatpush.msra.mxu0 0.0
      %1560 = vmatpush.msra.mxu0 0.0
      %1561 = vmatpush.msra.mxu0 %v1544
      %1562 = vmatmul.f32.gmra.mxu0 %v1447
      %v1563 = vpop.f32.mrf.mxu0
      %v1564 = vadd.f32 %v1443, %v1563
      %1565 = vmatmul.f32.gmra.mxu0 %v1450
      %v1566 = vpop.f32.mrf.mxu0
      %v1567 = vadd.f32 %v1443, %v1566
      %1568 = vmatmul.f32.gmra.mxu0 %v1453
      %v1569 = vpop.f32.mrf.mxu0
      %v1570 = vadd.f32 %v1443, %v1569
      %1571 = vmatmul.f32.gmra.mxu0 %v1456
      %v1572 = vpop.f32.mrf.mxu0
      %v1573 = vadd.f32 %v1443, %v1572
      %1574 = vmatmul.f32.gmra.mxu0 %v1459
      %v1575 = vpop.f32.mrf.mxu0
      %v1576 = vadd.f32 %v1443, %v1575
      %1577 = vmatmul.f32.gmra.mxu0 %v1462
      %v1578 = vpop.f32.mrf.mxu0
      %v1579 = vadd.f32 %v1443, %v1578
      %1580 = vmatmul.f32.gmra.mxu0 %v1465
      %v1581 = vpop.f32.mrf.mxu0
      %v1582 = vadd.f32 %v1443, %v1581
      %1583 = vmatmul.f32.gmra.mxu0 %v1468
      %v1584 = vpop.f32.mrf.mxu0
      %v1585 = vadd.f32 %v1443, %v1584
      %1586 = vmatmul.f32.gmra.mxu0 %v1471
      %v1587 = vpop.f32.mrf.mxu0
      %v1588 = vadd.f32 %v1443, %v1587
      %1589 = vmatmul.f32.gmra.mxu0 %v1474
      %v1590 = vpop.f32.mrf.mxu0
      %v1591 = vadd.f32 %v1443, %v1590
      %1592 = vmatmul.f32.gmra.mxu0 %v1477
      %v1593 = vpop.f32.mrf.mxu0
      %v1594 = vadd.f32 %v1443, %v1593
      %1595 = vmatmul.f32.gmra.mxu0 %v1480
      %v1596 = vpop.f32.mrf.mxu0
      %v1597 = vadd.f32 %v1443, %v1596
      %1598 = vmatmul.f32.gmra.mxu0 %v1483
      %v1599 = vpop.f32.mrf.mxu0
      %v1600 = vadd.f32 %v1443, %v1599
      %1601 = vmatmul.f32.gmra.mxu0 %v1486
      %v1602 = vpop.f32.mrf.mxu0
      %v1603 = vadd.f32 %v1443, %v1602
      %1604 = vmatmul.f32.gmra.mxu0 %v1489
      %v1605 = vpop.f32.mrf.mxu0
      %v1606 = vadd.f32 %v1443, %v1605
      %1607 = vmatmul.f32.gmra.mxu0 %v1492
      %v1608 = vpop.f32.mrf.mxu0
      %v1609 = vadd.f32 %v1443, %v1608
      %1610 = vmatmul.f32.gmra.mxu0 %v1495
      %v1611 = vpop.f32.mrf.mxu0
      %v1612 = vadd.f32 %v1443, %v1611
      %1613 = vmatmul.f32.gmra.mxu0 %v1498
      %v1614 = vpop.f32.mrf.mxu0
      %v1615 = vadd.f32 %v1443, %v1614
      %1616 = vmatmul.f32.gmra.mxu0 %v1501
      %v1617 = vpop.f32.mrf.mxu0
      %v1618 = vadd.f32 %v1443, %v1617
      %1619 = vmatmul.f32.gmra.mxu0 %v1504
      %v1620 = vpop.f32.mrf.mxu0
      %v1621 = vadd.f32 %v1443, %v1620
      %1622 = vmatmul.f32.gmra.mxu0 %v1507
      %v1623 = vpop.f32.mrf.mxu0
      %v1624 = vadd.f32 %v1443, %v1623
      %1625 = vmatmul.f32.gmra.mxu0 %v1510
      %v1626 = vpop.f32.mrf.mxu0
      %v1627 = vadd.f32 %v1443, %v1626
      %1628 = vmatmul.f32.gmra.mxu0 %v1513
      %v1629 = vpop.f32.mrf.mxu0
      %v1630 = vadd.f32 %v1443, %v1629
      %1631 = vmatmul.f32.gmra.mxu0 %v1516
      %v1632 = vpop.f32.mrf.mxu0
      %v1633 = vadd.f32 %v1443, %v1632
      %1634 = vmatmul.f32.gmra.mxu0 %v1519
      %v1635 = vpop.f32.mrf.mxu0
      %v1636 = vadd.f32 %v1443, %v1635
      %1637 = vmatmul.f32.gmra.mxu0 %v1522
      %v1638 = vpop.f32.mrf.mxu0
      %v1639 = vadd.f32 %v1443, %v1638
      %1640 = vmatmul.f32.gmra.mxu0 %v1525
      %v1641 = vpop.f32.mrf.mxu0
      %v1642 = vadd.f32 %v1443, %v1641
      %1643 = vmatmul.f32.gmra.mxu0 %v1528
      %v1644 = vpop.f32.mrf.mxu0
      %v1645 = vadd.f32 %v1443, %v1644
      %1646 = vmatmul.f32.gmra.mxu0 %v1531
      %v1647 = vpop.f32.mrf.mxu0
      %v1648 = vadd.f32 %v1443, %v1647
      %1649 = vmatmul.f32.gmra.mxu0 %v1534
      %v1650 = vpop.f32.mrf.mxu0
      %v1651 = vadd.f32 %v1443, %v1650
      %1652 = vmatmul.f32.gmra.mxu0 %v1537
      %v1653 = vpop.f32.mrf.mxu0
      %v1654 = vadd.f32 %v1443, %v1653
      %1655 = vmatmul.f32.gmra.mxu0 %v1540
      %v1656 = vpop.f32.mrf.mxu0
      %v1657 = vadd.f32 %v1443, %v1656
      %1658 = vdwg.mxu0
      %v1659 = vmax.f32 %v1564, 0.0
      %v1660 = vmax.f32 %v1567, 0.0
      %v1661 = vmax.f32 %v1570, 0.0
      %v1662 = vmax.f32 %v1573, 0.0
      %v1663 = vmax.f32 %v1576, 0.0
      %v1664 = vmax.f32 %v1579, 0.0
      %v1665 = vmax.f32 %v1582, 0.0
      %v1666 = vmax.f32 %v1585, 0.0
      %v1667 = vmax.f32 %v1588, 0.0
      %v1668 = vmax.f32 %v1591, 0.0
      %v1669 = vmax.f32 %v1594, 0.0
      %v1670 = vmax.f32 %v1597, 0.0
      %v1671 = vmax.f32 %v1600, 0.0
      %v1672 = vmax.f32 %v1603, 0.0
      %v1673 = vmax.f32 %v1606, 0.0
      %v1674 = vmax.f32 %v1609, 0.0
      %v1675 = vmax.f32 %v1612, 0.0
      %v1676 = vmax.f32 %v1615, 0.0
      %v1677 = vmax.f32 %v1618, 0.0
      %v1678 = vmax.f32 %v1621, 0.0
      %v1679 = vmax.f32 %v1624, 0.0
      %v1680 = vmax.f32 %v1627, 0.0
      %v1681 = vmax.f32 %v1630, 0.0
      %v1682 = vmax.f32 %v1633, 0.0
      %v1683 = vmax.f32 %v1636, 0.0
      %v1684 = vmax.f32 %v1639, 0.0
      %v1685 = vmax.f32 %v1642, 0.0
      %v1686 = vmax.f32 %v1645, 0.0
      %v1687 = vmax.f32 %v1648, 0.0
      %v1688 = vmax.f32 %v1651, 0.0
      %v1689 = vmax.f32 %v1654, 0.0
      %v1690 = vmax.f32 %v1657, 0.0
      %vm1691 = vcmask 64512
      %1692 = vst.msk [vmem:[%s292] sm:$0xff] %vm1691, %v1659
      %1693 = vst.msk [vmem:[%s292 + $0x8] sm:$0xff] %vm1691, %v1660
      %1694 = vst.msk [vmem:[%s292 + $0x10] sm:$0xff] %vm1691, %v1661
      %1695 = vst.msk [vmem:[%s292 + $0x18] sm:$0xff] %vm1691, %v1662
      %1696 = vst.msk [vmem:[%s292 + $0x20] sm:$0xff] %vm1691, %v1663
      %1697 = vst.msk [vmem:[%s292 + $0x28] sm:$0xff] %vm1691, %v1664
      %1698 = vst.msk [vmem:[%s292 + $0x30] sm:$0xff] %vm1691, %v1665
      %1699 = vst.msk [vmem:[%s292 + $0x38] sm:$0xff] %vm1691, %v1666
      %1700 = vst.msk [vmem:[%s292 + $0x40] sm:$0xff] %vm1691, %v1667
      %1701 = vst.msk [vmem:[%s292 + $0x48] sm:$0xff] %vm1691, %v1668
      %1702 = vst.msk [vmem:[%s292 + $0x50] sm:$0xff] %vm1691, %v1669
      %1703 = vst.msk [vmem:[%s292 + $0x58] sm:$0xff] %vm1691, %v1670
      %1704 = vst.msk [vmem:[%s292 + $0x60] sm:$0xff] %vm1691, %v1671
      %1705 = vst.msk [vmem:[%s292 + $0x68] sm:$0xff] %vm1691, %v1672
      %1706 = vst.msk [vmem:[%s292 + $0x70] sm:$0xff] %vm1691, %v1673
      %1707 = vst.msk [vmem:[%s292 + $0x78] sm:$0xff] %vm1691, %v1674
      %1708 = vst.msk [vmem:[%s292 + $0x80] sm:$0xff] %vm1691, %v1675
      %1709 = vst.msk [vmem:[%s292 + $0x88] sm:$0xff] %vm1691, %v1676
      %1710 = vst.msk [vmem:[%s292 + $0x90] sm:$0xff] %vm1691, %v1677
      %1711 = vst.msk [vmem:[%s292 + $0x98] sm:$0xff] %vm1691, %v1678
      %1712 = vst.msk [vmem:[%s292 + $0xa0] sm:$0xff] %vm1691, %v1679
      %1713 = vst.msk [vmem:[%s292 + $0xa8] sm:$0xff] %vm1691, %v1680
      %1714 = vst.msk [vmem:[%s292 + $0xb0] sm:$0xff] %vm1691, %v1681
      %1715 = vst.msk [vmem:[%s292 + $0xb8] sm:$0xff] %vm1691, %v1682
      %1716 = vst.msk [vmem:[%s292 + $0xc0] sm:$0xff] %vm1691, %v1683
      %1717 = vst.msk [vmem:[%s292 + $0xc8] sm:$0xff] %vm1691, %v1684
      %1718 = vst.msk [vmem:[%s292 + $0xd0] sm:$0xff] %vm1691, %v1685
      %1719 = vst.msk [vmem:[%s292 + $0xd8] sm:$0xff] %vm1691, %v1686
      %1720 = vst.msk [vmem:[%s292 + $0xe0] sm:$0xff] %vm1691, %v1687
      %1721 = vst.msk [vmem:[%s292 + $0xe8] sm:$0xff] %vm1691, %v1688
      %1722 = vst.msk [vmem:[%s292 + $0xf0] sm:$0xff] %vm1691, %v1689
      %1723 = vst.msk [vmem:[%s292 + $0xf8] sm:$0xff] %vm1691, %v1690
      %s1724 = smul.u32 32, %s22
      %p1725 = scmp.lt.s32.totalorder %s21, 1
      %s1726 = scalar_select %p1725, %s21, 1
      %p1727 = scmp.lt.s32.totalorder %s1724, 31
      %s1728 = scalar_select %p1727, %s1724, 31
      %p1729 = scmp.lt.s32.totalorder %s23, 0
      %s1730 = scalar_select %p1729, %s23, 0
      %s1731 = sadd.s32 %s1730, %s1728
      %s1732 = smul.addr %s1726, 32
      %s1733 = sadd.s32 %s1731, %s1732
      %s1734 = smul.addr %s1733, 8
      %s1735 = scalar_lea.vmem %s5, %s1734
      // Predicated region
      $region45: #{tpu_custom_call.1} parent=39 // pred_check
        %p1736 = pneg %p177
      $region46: #{tpu_custom_call.1} parent=39 // pred_check_branch
        %1738 = sbr.rel (%p1736) target = $region48
      $region47: #{tpu_custom_call.1} parent=39 // pred_region
        %s1739 = smul.u32 32, %s22
      $region48: #{tpu_custom_call.1} parent=39 // pred_fallthru
        _
    $region40: #{tpu_custom_call.1} parent=5 // pred_fallthru
      _
    %p1740 = scmp.le.s32.totalorder 2, %s11
    // Predicated region
    $region49: #{tpu_custom_call.1} parent=5 // pred_check
      %p1741 = pneg %p1740
    $region50: #{tpu_custom_call.1} parent=5 // pred_check_branch
      %1743 = sbr.rel (%p1741) target = $region52
    $region51: #{tpu_custom_call.1} parent=5 // pred_region
      %s1744 = ssub.s32 %s11, 2
      // Predicated region
      $region53: #{tpu_custom_call.1} parent=51 // pred_check
        %p1745 = pneg %p183
      $region54: #{tpu_custom_call.1} parent=51 // pred_check_branch
        %1747 = sbr.rel (%p1745) target = $region56
      $region55: #{tpu_custom_call.1} parent=51 // pred_region
        %s1748 = smul.u32 32, %s25
        %p1749 = scmp.lt.s32.totalorder %s24, 1
        %s1750 = scalar_select %p1749, %s24, 1
        %p1751 = scmp.lt.s32.totalorder %s1748, 31
        %s1752 = scalar_select %p1751, %s1748, 31
        %p1753 = scmp.lt.s32.totalorder %s26, 0
        %s1754 = scalar_select %p1753, %s26, 0
        %s1755 = sadd.s32 %s1754, %s1752
        %s1756 = smul.addr %s1750, 32
        %s1757 = sadd.s32 %s1755, %s1756
        %s1758 = smul.addr %s1757, 8
        %s1759 = scalar_lea.vmem %s5, %s1758
      $region56: #{tpu_custom_call.1} parent=51 // pred_fallthru
        _
    $region52: #{tpu_custom_call.1} parent=5 // pred_fallthru
      _
  $region6: #{tpu_custom_call.1} parent=0 // loop_footer
    %s15 = sadd.s32 1, %s11
  $region7: #{tpu_custom_call.1} parent=0 // loop_footer_branch
    %10 = sbr.rel target = $region3
  $region8: #{tpu_custom_call.1} parent=0 // loop_exit
    _

</llo_original>
